<compile_context>
chip_gen: v7x
topology: tpu7x:2x2x1
jax: 0.10.0
libtpu: 0.0.40
codegen_flags: <defaults>
</compile_context>

<pallas_src>
import functools

import jax
import jax.numpy as jnp
from jax.experimental import pallas as pl
from jax.experimental.pallas import tpu as pltpu


def _conv_tap_kernel(x_ref, w_ref, o_ref, *, KH, KW, stride, H_out, W_out, apply_relu):
    """One grid step = one padded image.

    x_ref: (1, Hp, Wp, C_in)             bf16 padded NHWC image
    w_ref: (KH, KW, C_in, C_out_pad)     bf16 weights (C_out padded to a multiple of 128)
    o_ref: (1, H_out, W_out, C_out_pad)  output (lane-dense last dim)
    """
    C_in = x_ref.shape[-1]
    C_out_p = o_ref.shape[-1]
    x = x_ref[0]  # (Hp, Wp, C_in) in VMEM
    acc = jnp.zeros((H_out * W_out, C_out_p), jnp.float32)
    for kh in range(KH):              # static, unrolled tap loop — no HBM im2col
        for kw in range(KW):
            if stride == 1:
                win = x[kh:kh + H_out, kw:kw + W_out, :]
            else:
                # TODO(synk): strided in-kernel slice path; only stride=1 is exercised below.
                win = jax.lax.slice(
                    x,
                    (kh, kw, 0),
                    (kh + stride * (H_out - 1) + 1, kw + stride * (W_out - 1) + 1, C_in),
                    (stride, stride, 1))
            win2 = win.reshape(H_out * W_out, C_in)
            acc = acc + jnp.dot(win2, w_ref[kh, kw],
                                preferred_element_type=jnp.float32)
    if apply_relu:
        acc = jnp.maximum(acc, 0.0)
    o_ref[0] = acc.reshape(H_out, W_out, C_out_p).astype(o_ref.dtype)


def basic_conv_forward(x_nchw, weight_oihw, *, stride=1, activation="relu",
                       compute_dtype=jnp.bfloat16):
    """Forward of BasicConv: Conv2d(bias=False, padding=k//2, stride) + optional ReLU."""
    N, C_in, H, W = x_nchw.shape
    C_out, C_in_w, KH, KW = weight_oihw.shape
    assert C_in == C_in_w and KH == KW
    pad = KH // 2
    H_out = (H + 2 * pad - KH) // stride + 1
    W_out = (W + 2 * pad - KW) // stride + 1
    Hp, Wp = H + 2 * pad, W + 2 * pad

    # Glue: NCHW -> NHWC, bf16 cast, small spatial pad (single small HBM pass).
    x_nhwc = jnp.transpose(x_nchw, (0, 2, 3, 1)).astype(compute_dtype)
    x_pad = jnp.pad(x_nhwc, ((0, 0), (pad, pad), (pad, pad), (0, 0)))

    # Weight: [C_out, C_in, KH, KW] -> [KH, KW, C_in, C_out_pad]; pad C_out to a lane-dense
    # multiple of 128 so output stores are unmasked.
    C_out_p = ((C_out + 127) // 128) * 128
    w = jnp.transpose(weight_oihw, (2, 3, 1, 0))
    if C_out_p != C_out:
        w = jnp.pad(w, ((0, 0), (0, 0), (0, 0), (0, C_out_p - C_out)))
    w = w.astype(compute_dtype)

    kernel = functools.partial(
        _conv_tap_kernel, KH=KH, KW=KW, stride=stride,
        H_out=H_out, W_out=W_out, apply_relu=(activation == "relu"))

    out = pl.pallas_call(
        kernel,
        out_shape=jax.ShapeDtypeStruct((N, H_out, W_out, C_out_p), x_nchw.dtype),
        grid_spec=pltpu.PrefetchScalarGridSpec(
            num_scalar_prefetch=0,
            grid=(N,),
            in_specs=[
                pl.BlockSpec((1, Hp, Wp, C_in), lambda n: (n, 0, 0, 0)),
                pl.BlockSpec((KH, KW, C_in, C_out_p), lambda n: (0, 0, 0, 0)),
            ],
            out_specs=pl.BlockSpec((1, H_out, W_out, C_out_p), lambda n: (n, 0, 0, 0)),
        ),
        compiler_params=pltpu.CompilerParams(
            dimension_semantics=("parallel",),       # megacore-shard batch on v7x
            vmem_limit_bytes=32 * 1024 * 1024,
        ),
    )(x_pad, w)

    out = out[..., :C_out]                           # drop lane padding
    return jnp.transpose(out, (0, 3, 1, 2))          # NHWC -> NCHW


def _reference_forward(x_nchw, weight_oihw, *, stride=1, activation="relu"):
    pad = weight_oihw.shape[2] // 2
    out = jax.lax.conv_general_dilated(
        x_nchw, weight_oihw,
        window_strides=(stride, stride),
        padding=((pad, pad), (pad, pad)),
        dimension_numbers=("NCHW", "OIHW", "NCHW"),
    )
    if activation == "relu":
        out = jnp.maximum(out, 0.0)
    return out


if __name__ == "__main__":
    # Small shapes consistent with the module's forward.
    N, C_in, C_out, H, W = 2, 4, 8, 16, 16
    kernel_size, stride = 3, 1

    key = jax.random.PRNGKey(0)
    kx, kw = jax.random.split(key)
    x = jax.random.normal(kx, (N, C_in, H, W), dtype=jnp.float32)
    # Deterministic in-script weight init (Conv2d weight shape [C_out, C_in, KH, KW], bias=False).
    weight = jax.random.normal(kw, (C_out, C_in, kernel_size, kernel_size),
                               dtype=jnp.float32) * 0.1

    fwd = jax.jit(functools.partial(basic_conv_forward, stride=stride, activation="relu"))
    out = jax.block_until_ready(fwd(x, weight))

    # Reference on the same bf16-rounded operands (the kernel accumulates in f32).
    ref = _reference_forward(
        x.astype(jnp.bfloat16).astype(jnp.float32),
        weight.astype(jnp.bfloat16).astype(jnp.float32),
        stride=stride, activation="relu")

    assert out.shape == ref.shape == (N, C_out, H, W)
    assert out.dtype == x.dtype
    assert jnp.allclose(out, ref, atol=1e-3, rtol=1e-3), float(jnp.max(jnp.abs(out - ref)))

    print("KERNEL_OK")
</pallas_src>

<mosaic_0001>
module attributes {stable_mosaic.version = 11 : i64} {
  func.func @_conv_tap_kernel(%arg0: i32, %arg1: memref<1x18x18x4xbf16, #tpu.memory_space<vmem>>, %arg2: memref<3x3x4x128xbf16, #tpu.memory_space<vmem>>, %arg3: memref<1x16x16x128xf32, #tpu.memory_space<vmem>>) attributes {dimension_semantics = [#tpu.dimension_semantics<parallel>], iteration_bounds = array<i64: 2>, scalar_prefetch = 0 : i64, scratch_operands = 0 : i64, tpu.core_type = #tpu.core_type<tc>, window_params = [{transform_indices = @transform_0, window_bounds = array<i64: 1, 18, 18, 4>}, {pipeline_mode = #tpu.pipeline_mode<synchronous>, transform_indices = @transform_1, window_bounds = array<i64: 3, 3, 4, 128>}, {transform_indices = @transform_2, window_bounds = array<i64: 1, 16, 16, 128>}]} {
    %c0 = arith.constant 0 : index
    %c0_0 = arith.constant 0 : index
    %c0_1 = arith.constant 0 : index
    %c0_2 = arith.constant 0 : index
    %0 = vector.load %arg1[%c0, %c0_0, %c0_1, %c0_2] : memref<1x18x18x4xbf16, #tpu.memory_space<vmem>>, vector<1x18x18x4xbf16>
    %1 = vector.shape_cast %0 : vector<1x18x18x4xbf16> to vector<18x18x4xbf16>
    %cst = arith.constant 0.000000e+00 : f32
    %2 = vector.broadcast %cst : f32 to vector<256x128xf32>
    %3 = vector.extract_strided_slice %1 {offsets = [0, 0, 0], sizes = [16, 16, 4], strides = [1, 1, 1]} : vector<18x18x4xbf16> to vector<16x16x4xbf16>
    %4 = vector.shape_cast %3 : vector<16x16x4xbf16> to vector<256x4xbf16>
    %c0_3 = arith.constant 0 : index
    %c0_4 = arith.constant 0 : index
    %c0_5 = arith.constant 0 : index
    %c0_6 = arith.constant 0 : index
    %5 = vector.load %arg2[%c0_3, %c0_4, %c0_5, %c0_6] : memref<3x3x4x128xbf16, #tpu.memory_space<vmem>>, vector<1x1x4x128xbf16>
    %6 = vector.shape_cast %5 : vector<1x1x4x128xbf16> to vector<4x128xbf16>
    %cst_7 = arith.constant dense<0.000000e+00> : vector<256x128xf32>
    %7 = tpu.matmul %4, %6, %cst_7 {dimension_numbers = #tpu.dot_dimension_numbers<[1], [0], [0], [1], [0, 0, 1, 1], [], []>} : vector<256x4xbf16>, vector<4x128xbf16>, vector<256x128xf32> -> vector<256x128xf32>
    %8 = arith.addf %2, %7 : vector<256x128xf32>
    %9 = vector.extract_strided_slice %1 {offsets = [0, 1, 0], sizes = [16, 16, 4], strides = [1, 1, 1]} : vector<18x18x4xbf16> to vector<16x16x4xbf16>
    %10 = vector.shape_cast %9 : vector<16x16x4xbf16> to vector<256x4xbf16>
    %c0_8 = arith.constant 0 : index
    %c1 = arith.constant 1 : index
    %c0_9 = arith.constant 0 : index
    %c0_10 = arith.constant 0 : index
    %11 = vector.load %arg2[%c0_8, %c1, %c0_9, %c0_10] : memref<3x3x4x128xbf16, #tpu.memory_space<vmem>>, vector<1x1x4x128xbf16>
    %12 = vector.shape_cast %11 : vector<1x1x4x128xbf16> to vector<4x128xbf16>
    %cst_11 = arith.constant dense<0.000000e+00> : vector<256x128xf32>
    %13 = tpu.matmul %10, %12, %cst_11 {dimension_numbers = #tpu.dot_dimension_numbers<[1], [0], [0], [1], [0, 0, 1, 1], [], []>} : vector<256x4xbf16>, vector<4x128xbf16>, vector<256x128xf32> -> vector<256x128xf32>
    %14 = arith.addf %8, %13 : vector<256x128xf32>
    %15 = vector.extract_strided_slice %1 {offsets = [0, 2, 0], sizes = [16, 16, 4], strides = [1, 1, 1]} : vector<18x18x4xbf16> to vector<16x16x4xbf16>
    %16 = vector.shape_cast %15 : vector<16x16x4xbf16> to vector<256x4xbf16>
    %c0_12 = arith.constant 0 : index
    %c2 = arith.constant 2 : index
    %c0_13 = arith.constant 0 : index
    %c0_14 = arith.constant 0 : index
    %17 = vector.load %arg2[%c0_12, %c2, %c0_13, %c0_14] : memref<3x3x4x128xbf16, #tpu.memory_space<vmem>>, vector<1x1x4x128xbf16>
    %18 = vector.shape_cast %17 : vector<1x1x4x128xbf16> to vector<4x128xbf16>
    %cst_15 = arith.constant dense<0.000000e+00> : vector<256x128xf32>
    %19 = tpu.matmul %16, %18, %cst_15 {dimension_numbers = #tpu.dot_dimension_numbers<[1], [0], [0], [1], [0, 0, 1, 1], [], []>} : vector<256x4xbf16>, vector<4x128xbf16>, vector<256x128xf32> -> vector<256x128xf32>
    %20 = arith.addf %14, %19 : vector<256x128xf32>
    %21 = vector.extract_strided_slice %1 {offsets = [1, 0, 0], sizes = [16, 16, 4], strides = [1, 1, 1]} : vector<18x18x4xbf16> to vector<16x16x4xbf16>
    %22 = vector.shape_cast %21 : vector<16x16x4xbf16> to vector<256x4xbf16>
    %c1_16 = arith.constant 1 : index
    %c0_17 = arith.constant 0 : index
    %c0_18 = arith.constant 0 : index
    %c0_19 = arith.constant 0 : index
    %23 = vector.load %arg2[%c1_16, %c0_17, %c0_18, %c0_19] : memref<3x3x4x128xbf16, #tpu.memory_space<vmem>>, vector<1x1x4x128xbf16>
    %24 = vector.shape_cast %23 : vector<1x1x4x128xbf16> to vector<4x128xbf16>
    %cst_20 = arith.constant dense<0.000000e+00> : vector<256x128xf32>
    %25 = tpu.matmul %22, %24, %cst_20 {dimension_numbers = #tpu.dot_dimension_numbers<[1], [0], [0], [1], [0, 0, 1, 1], [], []>} : vector<256x4xbf16>, vector<4x128xbf16>, vector<256x128xf32> -> vector<256x128xf32>
    %26 = arith.addf %20, %25 : vector<256x128xf32>
    %27 = vector.extract_strided_slice %1 {offsets = [1, 1, 0], sizes = [16, 16, 4], strides = [1, 1, 1]} : vector<18x18x4xbf16> to vector<16x16x4xbf16>
    %28 = vector.shape_cast %27 : vector<16x16x4xbf16> to vector<256x4xbf16>
    %c1_21 = arith.constant 1 : index
    %c1_22 = arith.constant 1 : index
    %c0_23 = arith.constant 0 : index
    %c0_24 = arith.constant 0 : index
    %29 = vector.load %arg2[%c1_21, %c1_22, %c0_23, %c0_24] : memref<3x3x4x128xbf16, #tpu.memory_space<vmem>>, vector<1x1x4x128xbf16>
    %30 = vector.shape_cast %29 : vector<1x1x4x128xbf16> to vector<4x128xbf16>
    %cst_25 = arith.constant dense<0.000000e+00> : vector<256x128xf32>
    %31 = tpu.matmul %28, %30, %cst_25 {dimension_numbers = #tpu.dot_dimension_numbers<[1], [0], [0], [1], [0, 0, 1, 1], [], []>} : vector<256x4xbf16>, vector<4x128xbf16>, vector<256x128xf32> -> vector<256x128xf32>
    %32 = arith.addf %26, %31 : vector<256x128xf32>
    %33 = vector.extract_strided_slice %1 {offsets = [1, 2, 0], sizes = [16, 16, 4], strides = [1, 1, 1]} : vector<18x18x4xbf16> to vector<16x16x4xbf16>
    %34 = vector.shape_cast %33 : vector<16x16x4xbf16> to vector<256x4xbf16>
    %c1_26 = arith.constant 1 : index
    %c2_27 = arith.constant 2 : index
    %c0_28 = arith.constant 0 : index
    %c0_29 = arith.constant 0 : index
    %35 = vector.load %arg2[%c1_26, %c2_27, %c0_28, %c0_29] : memref<3x3x4x128xbf16, #tpu.memory_space<vmem>>, vector<1x1x4x128xbf16>
    %36 = vector.shape_cast %35 : vector<1x1x4x128xbf16> to vector<4x128xbf16>
    %cst_30 = arith.constant dense<0.000000e+00> : vector<256x128xf32>
    %37 = tpu.matmul %34, %36, %cst_30 {dimension_numbers = #tpu.dot_dimension_numbers<[1], [0], [0], [1], [0, 0, 1, 1], [], []>} : vector<256x4xbf16>, vector<4x128xbf16>, vector<256x128xf32> -> vector<256x128xf32>
    %38 = arith.addf %32, %37 : vector<256x128xf32>
    %39 = vector.extract_strided_slice %1 {offsets = [2, 0, 0], sizes = [16, 16, 4], strides = [1, 1, 1]} : vector<18x18x4xbf16> to vector<16x16x4xbf16>
    %40 = vector.shape_cast %39 : vector<16x16x4xbf16> to vector<256x4xbf16>
    %c2_31 = arith.constant 2 : index
    %c0_32 = arith.constant 0 : index
    %c0_33 = arith.constant 0 : index
    %c0_34 = arith.constant 0 : index
    %41 = vector.load %arg2[%c2_31, %c0_32, %c0_33, %c0_34] : memref<3x3x4x128xbf16, #tpu.memory_space<vmem>>, vector<1x1x4x128xbf16>
    %42 = vector.shape_cast %41 : vector<1x1x4x128xbf16> to vector<4x128xbf16>
    %cst_35 = arith.constant dense<0.000000e+00> : vector<256x128xf32>
    %43 = tpu.matmul %40, %42, %cst_35 {dimension_numbers = #tpu.dot_dimension_numbers<[1], [0], [0], [1], [0, 0, 1, 1], [], []>} : vector<256x4xbf16>, vector<4x128xbf16>, vector<256x128xf32> -> vector<256x128xf32>
    %44 = arith.addf %38, %43 : vector<256x128xf32>
    %45 = vector.extract_strided_slice %1 {offsets = [2, 1, 0], sizes = [16, 16, 4], strides = [1, 1, 1]} : vector<18x18x4xbf16> to vector<16x16x4xbf16>
    %46 = vector.shape_cast %45 : vector<16x16x4xbf16> to vector<256x4xbf16>
    %c2_36 = arith.constant 2 : index
    %c1_37 = arith.constant 1 : index
    %c0_38 = arith.constant 0 : index
    %c0_39 = arith.constant 0 : index
    %47 = vector.load %arg2[%c2_36, %c1_37, %c0_38, %c0_39] : memref<3x3x4x128xbf16, #tpu.memory_space<vmem>>, vector<1x1x4x128xbf16>
    %48 = vector.shape_cast %47 : vector<1x1x4x128xbf16> to vector<4x128xbf16>
    %cst_40 = arith.constant dense<0.000000e+00> : vector<256x128xf32>
    %49 = tpu.matmul %46, %48, %cst_40 {dimension_numbers = #tpu.dot_dimension_numbers<[1], [0], [0], [1], [0, 0, 1, 1], [], []>} : vector<256x4xbf16>, vector<4x128xbf16>, vector<256x128xf32> -> vector<256x128xf32>
    %50 = arith.addf %44, %49 : vector<256x128xf32>
    %51 = vector.extract_strided_slice %1 {offsets = [2, 2, 0], sizes = [16, 16, 4], strides = [1, 1, 1]} : vector<18x18x4xbf16> to vector<16x16x4xbf16>
    %52 = vector.shape_cast %51 : vector<16x16x4xbf16> to vector<256x4xbf16>
    %c2_41 = arith.constant 2 : index
    %c2_42 = arith.constant 2 : index
    %c0_43 = arith.constant 0 : index
    %c0_44 = arith.constant 0 : index
    %53 = vector.load %arg2[%c2_41, %c2_42, %c0_43, %c0_44] : memref<3x3x4x128xbf16, #tpu.memory_space<vmem>>, vector<1x1x4x128xbf16>
    %54 = vector.shape_cast %53 : vector<1x1x4x128xbf16> to vector<4x128xbf16>
    %cst_45 = arith.constant dense<0.000000e+00> : vector<256x128xf32>
    %55 = tpu.matmul %52, %54, %cst_45 {dimension_numbers = #tpu.dot_dimension_numbers<[1], [0], [0], [1], [0, 0, 1, 1], [], []>} : vector<256x4xbf16>, vector<4x128xbf16>, vector<256x128xf32> -> vector<256x128xf32>
    %56 = arith.addf %50, %55 : vector<256x128xf32>
    %cst_46 = arith.constant 0.000000e+00 : f32
    %57 = vector.broadcast %cst_46 : f32 to vector<256x128xf32>
    %58 = arith.maximumf %56, %57 : vector<256x128xf32>
    %59 = vector.shape_cast %58 : vector<256x128xf32> to vector<16x16x128xf32>
    %c0_47 = arith.constant 0 : index
    %c0_48 = arith.constant 0 : index
    %c0_49 = arith.constant 0 : index
    %c0_50 = arith.constant 0 : index
    %60 = vector.load %arg3[%c0_47, %c0_48, %c0_49, %c0_50] : memref<1x16x16x128xf32, #tpu.memory_space<vmem>>, vector<1x16x16x128xf32>
    %61 = vector.shape_cast %60 : vector<1x16x16x128xf32> to vector<16x16x128xf32>
    %62 = vector.shape_cast %59 : vector<16x16x128xf32> to vector<1x16x16x128xf32>
    tpu.vector_store %arg3[%c0_47, %c0_48, %c0_49, %c0_50], %62 {strides = array<i32>} : memref<1x16x16x128xf32, #tpu.memory_space<vmem>>, vector<1x16x16x128xf32>,
    return
  }
  func.func @transform_0(%arg0: i32) -> (i32, i32, i32, i32) {
    %c0_i32 = arith.constant 0 : i32
    %c0_i32_0 = arith.constant 0 : i32
    %c0_i32_1 = arith.constant 0 : i32
    %c0_i32_2 = arith.constant 0 : i32
    return %arg0, %c0_i32, %c0_i32_0, %c0_i32_1 : i32, i32, i32, i32
  }
  func.func @transform_1(%arg0: i32) -> (i32, i32, i32, i32) {
    %c0_i32 = arith.constant 0 : i32
    %c0_i32_0 = arith.constant 0 : i32
    %c0_i32_1 = arith.constant 0 : i32
    %c0_i32_2 = arith.constant 0 : i32
    %c0_i32_3 = arith.constant 0 : i32
    return %c0_i32, %c0_i32_0, %c0_i32_1, %c0_i32_2 : i32, i32, i32, i32
  }
  func.func @transform_2(%arg0: i32) -> (i32, i32, i32, i32) {
    %c0_i32 = arith.constant 0 : i32
    %c0_i32_0 = arith.constant 0 : i32
    %c0_i32_1 = arith.constant 0 : i32
    %c0_i32_2 = arith.constant 0 : i32
    return %arg0, %c0_i32, %c0_i32_0, %c0_i32_1 : i32, i32, i32, i32
  }
}

</mosaic_0001>

<llo_original>
// kernel: basic_conv_forward.1
$region0: #{basic_conv_forward.1}
  #allocation0 [shape = 'u32[]', space=smem, size = 0x4, offset = 0x4, fixed_abs, tag = 'smem constant byte address 0x4 - core index']
  #allocation1 [shape = 'u32[144,128]{1,0:T(1,128)}', space=vmem, size = 0x12000, scoped, tag = 'internal scratch']
  %s0 = inlined_call_operand.vmem [shape: bf16[2,18,18,4], index: 0, kind: input, shape index: {}]
  %s1 = inlined_call_operand.vmem [shape: bf16[3,3,4,128], index: 1, kind: input, shape index: {}]
  %s2 = inlined_call_operand.vmem [shape: f32[2,16,16,128], index: 2, kind: output, shape index: {}]
  %s3 = sld [smem:[#allocation0]]
  $region41: #{basic_conv_forward.1} parent=0
    _
  %s5 = ssub.s32 1, %s3
  %s6 = scalar_select 0, %s5, %s3
  loop: start=0, step=1, limit=4
  $region2: #{basic_conv_forward.1} parent=0 // loop_pre_header
    _
  $region3: #{basic_conv_forward.1} parent=0 // loop_header
    %s8 = sphi 0, %s12
    %p9 = scmp.ge.s32.totalorder %s8, 4
    %s18 = sphi 0, %s20
    %s21 = sphi 0, %s18
    %s22 = sphi 0, %s21
    %s38 = sphi 0, %s22
    %s42 = sphi 0, %s42
    %s44 = sphi 0, %s42
    %s45 = sphi 0, %s44
    %s59 = sphi 0, %s45
    %s65 = sphi 0, %s67
    %s68 = sphi 0, %s65
    %s69 = sphi 0, %s68
    %s85 = sphi 0, %s69
  $region4: #{basic_conv_forward.1} parent=0 // loop_header_branch
    %11 = sbr.rel (%p9) target = $region8
  $region5: #{basic_conv_forward.1} parent=0 // loop_body
    %s13 = ssub.s32 %s8, 1
    %s14 = ssub.s32 %s8, 2
    %s15 = sadd.s32 %s8, 1
    %s16 = ssub.s32 %s8, %s15
    %p17 = scmp.eq.s32.totalorder %s16, 0
    %s19 = sadd.s32 %s18, 1
    %s20 = scalar_select %p17, %s18, %s19
    %p23 = pneg %p17
    %p24 = scmp.eq.s32.totalorder %s8, 1
    %p25 = por %p23, %p24
    %p26 = scmp.ne.s32.totalorder %s18, %s21
    %p27 = scmp.eq.s32.totalorder %s8, 0
    %p28 = por %p26, %p27
    %p29 = scmp.ne.s32.totalorder %s18, %s21
    %p30 = scmp.eq.s32.totalorder %s13, 1
    %p31 = por %p29, %p30
    %p32 = scmp.ne.s32.totalorder %s21, %s22
    %p33 = scmp.eq.s32.totalorder %s13, 0
    %p34 = por %p32, %p33
    %p35 = scmp.ne.s32.totalorder %s21, %s22
    %p36 = scmp.eq.s32.totalorder %s14, 1
    %p37 = por %p35, %p36
    %p39 = scmp.ne.s32.totalorder %s22, %s38
    %p40 = scmp.eq.s32.totalorder %s14, 0
    %p41 = por %p39, %p40
    %s43 = sadd.s32 %s42, 1
    %p46 = scmp.eq.s32.totalorder %s8, 1
    %p47 = scmp.ne.s32.totalorder %s42, %s44
    %p48 = scmp.eq.s32.totalorder %s8, 0
    %p49 = por %p47, %p48
    %p50 = scmp.ne.s32.totalorder %s42, %s44
    %p51 = scmp.eq.s32.totalorder %s13, 1
    %p52 = por %p50, %p51
    %p53 = scmp.ne.s32.totalorder %s44, %s45
    %p54 = scmp.eq.s32.totalorder %s13, 0
    %p55 = por %p53, %p54
    %p56 = scmp.ne.s32.totalorder %s44, %s45
    %p57 = scmp.eq.s32.totalorder %s14, 1
    %p58 = por %p56, %p57
    %p60 = scmp.ne.s32.totalorder %s45, %s59
    %p61 = scmp.eq.s32.totalorder %s14, 0
    %p62 = por %p60, %p61
    %s63 = ssub.s32 %s8, %s15
    %p64 = scmp.eq.s32.totalorder %s63, 0
    %s66 = sadd.s32 %s65, 1
    %s67 = scalar_select %p64, %s65, %s66
    %p70 = pneg %p64
    %p71 = scmp.eq.s32.totalorder %s8, 1
    %p72 = por %p70, %p71
    %p73 = scmp.ne.s32.totalorder %s65, %s68
    %p74 = scmp.eq.s32.totalorder %s8, 0
    %p75 = por %p73, %p74
    %p76 = scmp.ne.s32.totalorder %s65, %s68
    %p77 = scmp.eq.s32.totalorder %s13, 1
    %p78 = por %p76, %p77
    %p79 = scmp.ne.s32.totalorder %s68, %s69
    %p80 = scmp.eq.s32.totalorder %s13, 0
    %p81 = por %p79, %p80
    %p82 = scmp.ne.s32.totalorder %s68, %s69
    %p83 = scmp.eq.s32.totalorder %s14, 1
    %p84 = por %p82, %p83
    %p86 = scmp.ne.s32.totalorder %s69, %s85
    %p87 = scmp.eq.s32.totalorder %s14, 0
    %p88 = por %p86, %p87
    %p89 = scmp.le.s32.totalorder 1, %s8
    %p90 = scmp.lt.s32.totalorder %s8, 3
    %p91 = pnand %p89, %p90
    %p92 = pneg %p91
    // Predicated region
    $region9: #{basic_conv_forward.1} parent=5 // pred_check
      _
    $region10: #{basic_conv_forward.1} parent=5 // pred_check_branch
      %94 = sbr.rel (%p91) target = $region12
    $region11: #{basic_conv_forward.1} parent=5 // pred_region
      %s95 = ssub.s32 %s8, 1
      // Predicated region
      $region13: #{basic_conv_forward.1} parent=11 // pred_check
        %p96 = pneg %p55
      $region14: #{basic_conv_forward.1} parent=11 // pred_check_branch
        %98 = sbr.rel (%p96) target = $region16
      $region15: #{basic_conv_forward.1} parent=11 // pred_region
        _
      $region16: #{basic_conv_forward.1} parent=11 // pred_fallthru
        _
    $region12: #{basic_conv_forward.1} parent=5 // pred_fallthru
      _
    %p99 = scmp.lt.s32.totalorder %s8, 2
    // Predicated region
    $region17: #{basic_conv_forward.1} parent=5 // pred_check
      %p100 = pneg %p99
    $region18: #{basic_conv_forward.1} parent=5 // pred_check_branch
      %102 = sbr.rel (%p100) target = $region20
    $region19: #{basic_conv_forward.1} parent=5 // pred_region
      // Predicated region
      $region21: #{basic_conv_forward.1} parent=19 // pred_check
        %p103 = pneg %p28
      $region22: #{basic_conv_forward.1} parent=19 // pred_check_branch
        %105 = sbr.rel (%p103) target = $region24
      $region23: #{basic_conv_forward.1} parent=19 // pred_region
        %p106 = scmp.lt.s32.totalorder %s8, 1
        %s107 = scalar_select %p106, %s8, 1
        %s108 = smul.addr %s107, 54
        %s109 = smul.addr %s108, 4
        %s110 = scalar_lea.vmem %s0, %s109
      $region24: #{basic_conv_forward.1} parent=19 // pred_fallthru
        _
    $region20: #{basic_conv_forward.1} parent=5 // pred_fallthru
      _
    %p111 = scmp.le.s32.totalorder 1, %s8
    %p112 = scmp.lt.s32.totalorder %s8, 3
    %p113 = pnand %p111, %p112
    %p114 = pneg %p113
    // Predicated region
    $region25: #{basic_conv_forward.1} parent=5 // pred_check
      _
    $region26: #{basic_conv_forward.1} parent=5 // pred_check_branch
      %116 = sbr.rel (%p113) target = $region28
    $region27: #{basic_conv_forward.1} parent=5 // pred_region
      %s117 = ssub.s32 %s8, 1
      %p118 = scmp.lt.s32.totalorder %s13, 1
      %s119 = scalar_select %p118, %s13, 1
      %s120 = smul.addr %s119, 54
      %s121 = smul.addr %s120, 4
      %s122 = scalar_lea.vmem %s0, %s121
      %p123 = pneg %p34
      %p124 = pneg %p31
      %p125 = pneg %p55
      %p126 = pneg %p52
      %p127 = pneg %p81
      %p128 = pneg %p78
      %p129 = scmp.lt.s32.totalorder %s13, 1
      %s130 = scalar_select %p129, %s13, 1
      %s131 = smul.addr %s130, 32
      %s132 = smul.addr %s131, 8
      %s133 = scalar_lea.vmem %s2, %s132
      %p134 = scmp.lt.s32.totalorder %s13, 1
      %s135 = scalar_select %p134, %s13, 1
      %s136 = smul.addr %s135, 54
      %s137 = smul.addr %s136, 4
      %s138 = scalar_lea.vmem %s0, %s137
      %p139 = scmp.lt.s32.totalorder %s13, 1
      %s140 = scalar_select %p139, %s13, 1
      %s141 = smul.addr %s140, 32
      %s142 = smul.addr %s141, 8
      %s143 = scalar_lea.vmem %s2, %s142
      %v145 = vld [vmem:[%s138] sm:$0xf]
      %v146 = vld [vmem:[%s138 + $0x4] sm:$0xf]
      %v147 = vld [vmem:[%s138 + $0x8] sm:$0x1]
      %v148 = vld [vmem:[%s138 + $0xc] sm:$0xf]
      %v149 = vld [vmem:[%s138 + $0x10] sm:$0xf]
      %v150 = vld [vmem:[%s138 + $0x14] sm:$0x1]
      %v151 = vld [vmem:[%s138 + $0x18] sm:$0xf]
      %v152 = vld [vmem:[%s138 + $0x1c] sm:$0xf]
      %v153 = vld [vmem:[%s138 + $0x20] sm:$0x1]
      %v154 = vld [vmem:[%s138 + $0x24] sm:$0xf]
      %v155 = vld [vmem:[%s138 + $0x28] sm:$0xf]
      %v156 = vld [vmem:[%s138 + $0x2c] sm:$0x1]
      %v157 = vld [vmem:[%s138 + $0x30] sm:$0xf]
      %v158 = vld [vmem:[%s138 + $0x34] sm:$0xf]
      %v159 = vld [vmem:[%s138 + $0x38] sm:$0x1]
      %v160 = vld [vmem:[%s138 + $0x3c] sm:$0xf]
      %v161 = vld [vmem:[%s138 + $0x40] sm:$0xf]
      %v162 = vld [vmem:[%s138 + $0x44] sm:$0x1]
      %v163 = vld [vmem:[%s138 + $0x48] sm:$0xf]
      %v164 = vld [vmem:[%s138 + $0x4c] sm:$0xf]
      %v165 = vld [vmem:[%s138 + $0x50] sm:$0x1]
      %v166 = vld [vmem:[%s138 + $0x54] sm:$0xf]
      %v167 = vld [vmem:[%s138 + $0x58] sm:$0xf]
      %v168 = vld [vmem:[%s138 + $0x5c] sm:$0x1]
      %v169 = vld [vmem:[%s138 + $0x60] sm:$0xf]
      %v170 = vld [vmem:[%s138 + $0x64] sm:$0xf]
      %v171 = vld [vmem:[%s138 + $0x68] sm:$0x1]
      %v172 = vld [vmem:[%s138 + $0x6c] sm:$0xf]
      %v173 = vld [vmem:[%s138 + $0x70] sm:$0xf]
      %v174 = vld [vmem:[%s138 + $0x74] sm:$0x1]
      %v175 = vld [vmem:[%s138 + $0x78] sm:$0xf]
      %v176 = vld [vmem:[%s138 + $0x7c] sm:$0xf]
      %v177 = vld [vmem:[%s138 + $0x80] sm:$0x1]
      %v178 = vld [vmem:[%s138 + $0x84] sm:$0xf]
      %v179 = vld [vmem:[%s138 + $0x88] sm:$0xf]
      %v180 = vld [vmem:[%s138 + $0x8c] sm:$0x1]
      %v181 = vld [vmem:[%s138 + $0x90] sm:$0xf]
      %v182 = vld [vmem:[%s138 + $0x94] sm:$0xf]
      %v183 = vld [vmem:[%s138 + $0x98] sm:$0x1]
      %v184 = vld [vmem:[%s138 + $0x9c] sm:$0xf]
      %v185 = vld [vmem:[%s138 + $0xa0] sm:$0xf]
      %v186 = vld [vmem:[%s138 + $0xa4] sm:$0x1]
      %v187 = vld [vmem:[%s138 + $0xa8] sm:$0xf]
      %v188 = vld [vmem:[%s138 + $0xac] sm:$0xf]
      %v189 = vld [vmem:[%s138 + $0xb0] sm:$0x1]
      %v190 = vld [vmem:[%s138 + $0xb4] sm:$0xf]
      %v191 = vld [vmem:[%s138 + $0xb8] sm:$0xf]
      %v192 = vld [vmem:[%s138 + $0xbc] sm:$0x1]
      %v193 = vld [vmem:[%s138 + $0xc0] sm:$0xf]
      %v194 = vld [vmem:[%s138 + $0xc4] sm:$0xf]
      %v195 = vld [vmem:[%s138 + $0xc8] sm:$0x1]
      %v196 = vld [vmem:[%s138 + $0xcc] sm:$0xf]
      %v197 = vld [vmem:[%s138 + $0xd0] sm:$0xf]
      %v198 = vld [vmem:[%s138 + $0xd4] sm:$0x1]
      %v199 = vld [vmem:[%s1] sm:$0x3]
      %vm200 = vsmask.f32 3328
      %vm201 = vsmask.f32 7440
      %vm202 = vmor %vm200, %vm201
      %v204 = vshrl.u32 %v145, 16
      %v206 = vrot.slane %v204, 4
      %v207 = vshll.u32 %v145, 16
      %v209 = vrot.slane %v207, 5
      %v210 = vor.u32 %v206, %v209
      %v211 = vrot.slane %v210, 4
      %v213 = vshll.u32 %v146, 16
      %v215 = vrot.slane %v213, 5
      %v216 = vsel %vm202, %v211, %v215
      %v217 = vshrl.u32 %v146, 16
      %v219 = vrot.slane %v217, 4
      %v220 = vor.u32 %v219, %v215
      %v221 = vrot.slane %v220, 4
      %v223 = vshll.u32 %v147, 16
      %v225 = vrot.slane %v223, 5
      %v226 = vsel %vm202, %v221, %v225
      %v228 = vshrl.u32 %v148, 16
      %v230 = vrot.slane %v228, 4
      %v231 = vshll.u32 %v148, 16
      %v233 = vrot.slane %v231, 5
      %v234 = vor.u32 %v230, %v233
      %v235 = vrot.slane %v234, 4
      %v237 = vshll.u32 %v149, 16
      %v239 = vrot.slane %v237, 5
      %v240 = vsel %vm202, %v235, %v239
      %v241 = vshrl.u32 %v149, 16
      %v243 = vrot.slane %v241, 4
      %v244 = vor.u32 %v243, %v239
      %v245 = vrot.slane %v244, 4
      %v247 = vshll.u32 %v150, 16
      %v249 = vrot.slane %v247, 5
      %v250 = vsel %vm202, %v245, %v249
      %v252 = vshrl.u32 %v151, 16
      %v254 = vrot.slane %v252, 4
      %v255 = vshll.u32 %v151, 16
      %v257 = vrot.slane %v255, 5
      %v258 = vor.u32 %v254, %v257
      %v259 = vrot.slane %v258, 4
      %v261 = vshll.u32 %v152, 16
      %v263 = vrot.slane %v261, 5
      %v264 = vsel %vm202, %v259, %v263
      %v265 = vshrl.u32 %v152, 16
      %v267 = vrot.slane %v265, 4
      %v268 = vor.u32 %v267, %v263
      %v269 = vrot.slane %v268, 4
      %v271 = vshll.u32 %v153, 16
      %v273 = vrot.slane %v271, 5
      %v274 = vsel %vm202, %v269, %v273
      %v276 = vshrl.u32 %v154, 16
      %v278 = vrot.slane %v276, 4
      %v279 = vshll.u32 %v154, 16
      %v281 = vrot.slane %v279, 5
      %v282 = vor.u32 %v278, %v281
      %v283 = vrot.slane %v282, 4
      %v285 = vshll.u32 %v155, 16
      %v287 = vrot.slane %v285, 5
      %v288 = vsel %vm202, %v283, %v287
      %v289 = vshrl.u32 %v155, 16
      %v291 = vrot.slane %v289, 4
      %v292 = vor.u32 %v291, %v287
      %v293 = vrot.slane %v292, 4
      %v295 = vshll.u32 %v156, 16
      %v297 = vrot.slane %v295, 5
      %v298 = vsel %vm202, %v293, %v297
      %v300 = vshrl.u32 %v157, 16
      %v302 = vrot.slane %v300, 4
      %v303 = vshll.u32 %v157, 16
      %v305 = vrot.slane %v303, 5
      %v306 = vor.u32 %v302, %v305
      %v307 = vrot.slane %v306, 4
      %v309 = vshll.u32 %v158, 16
      %v311 = vrot.slane %v309, 5
      %v312 = vsel %vm202, %v307, %v311
      %v313 = vshrl.u32 %v158, 16
      %v315 = vrot.slane %v313, 4
      %v316 = vor.u32 %v315, %v311
      %v317 = vrot.slane %v316, 4
      %v319 = vshll.u32 %v159, 16
      %v321 = vrot.slane %v319, 5
      %v322 = vsel %vm202, %v317, %v321
      %v324 = vshrl.u32 %v160, 16
      %v326 = vrot.slane %v324, 4
      %v327 = vshll.u32 %v160, 16
      %v329 = vrot.slane %v327, 5
      %v330 = vor.u32 %v326, %v329
      %v331 = vrot.slane %v330, 4
      %v333 = vshll.u32 %v161, 16
      %v335 = vrot.slane %v333, 5
      %v336 = vsel %vm202, %v331, %v335
      %v337 = vshrl.u32 %v161, 16
      %v339 = vrot.slane %v337, 4
      %v340 = vor.u32 %v339, %v335
      %v341 = vrot.slane %v340, 4
      %v343 = vshll.u32 %v162, 16
      %v345 = vrot.slane %v343, 5
      %v346 = vsel %vm202, %v341, %v345
      %v348 = vshrl.u32 %v163, 16
      %v350 = vrot.slane %v348, 4
      %v351 = vshll.u32 %v163, 16
      %v353 = vrot.slane %v351, 5
      %v354 = vor.u32 %v350, %v353
      %v355 = vrot.slane %v354, 4
      %v357 = vshll.u32 %v164, 16
      %v359 = vrot.slane %v357, 5
      %v360 = vsel %vm202, %v355, %v359
      %v361 = vshrl.u32 %v164, 16
      %v363 = vrot.slane %v361, 4
      %v364 = vor.u32 %v363, %v359
      %v365 = vrot.slane %v364, 4
      %v367 = vshll.u32 %v165, 16
      %v369 = vrot.slane %v367, 5
      %v370 = vsel %vm202, %v365, %v369
      %v372 = vshrl.u32 %v166, 16
      %v374 = vrot.slane %v372, 4
      %v375 = vshll.u32 %v166, 16
      %v377 = vrot.slane %v375, 5
      %v378 = vor.u32 %v374, %v377
      %v379 = vrot.slane %v378, 4
      %v381 = vshll.u32 %v167, 16
      %v383 = vrot.slane %v381, 5
      %v384 = vsel %vm202, %v379, %v383
      %v385 = vshrl.u32 %v167, 16
      %v387 = vrot.slane %v385, 4
      %v388 = vor.u32 %v387, %v383
      %v389 = vrot.slane %v388, 4
      %v391 = vshll.u32 %v168, 16
      %v393 = vrot.slane %v391, 5
      %v394 = vsel %vm202, %v389, %v393
      %v396 = vshrl.u32 %v169, 16
      %v398 = vrot.slane %v396, 4
      %v399 = vshll.u32 %v169, 16
      %v401 = vrot.slane %v399, 5
      %v402 = vor.u32 %v398, %v401
      %v403 = vrot.slane %v402, 4
      %v405 = vshll.u32 %v170, 16
      %v407 = vrot.slane %v405, 5
      %v408 = vsel %vm202, %v403, %v407
      %v409 = vshrl.u32 %v170, 16
      %v411 = vrot.slane %v409, 4
      %v412 = vor.u32 %v411, %v407
      %v413 = vrot.slane %v412, 4
      %v415 = vshll.u32 %v171, 16
      %v417 = vrot.slane %v415, 5
      %v418 = vsel %vm202, %v413, %v417
      %v420 = vshrl.u32 %v172, 16
      %v422 = vrot.slane %v420, 4
      %v423 = vshll.u32 %v172, 16
      %v425 = vrot.slane %v423, 5
      %v426 = vor.u32 %v422, %v425
      %v427 = vrot.slane %v426, 4
      %v429 = vshll.u32 %v173, 16
      %v431 = vrot.slane %v429, 5
      %v432 = vsel %vm202, %v427, %v431
      %v433 = vshrl.u32 %v173, 16
      %v435 = vrot.slane %v433, 4
      %v436 = vor.u32 %v435, %v431
      %v437 = vrot.slane %v436, 4
      %v439 = vshll.u32 %v174, 16
      %v441 = vrot.slane %v439, 5
      %v442 = vsel %vm202, %v437, %v441
      %v444 = vshrl.u32 %v175, 16
      %v446 = vrot.slane %v444, 4
      %v447 = vshll.u32 %v175, 16
      %v449 = vrot.slane %v447, 5
      %v450 = vor.u32 %v446, %v449
      %v451 = vrot.slane %v450, 4
      %v453 = vshll.u32 %v176, 16
      %v455 = vrot.slane %v453, 5
      %v456 = vsel %vm202, %v451, %v455
      %v457 = vshrl.u32 %v176, 16
      %v459 = vrot.slane %v457, 4
      %v460 = vor.u32 %v459, %v455
      %v461 = vrot.slane %v460, 4
      %v463 = vshll.u32 %v177, 16
      %v465 = vrot.slane %v463, 5
      %v466 = vsel %vm202, %v461, %v465
      %v468 = vshrl.u32 %v178, 16
      %v470 = vrot.slane %v468, 4
      %v471 = vshll.u32 %v178, 16
      %v473 = vrot.slane %v471, 5
      %v474 = vor.u32 %v470, %v473
      %v475 = vrot.slane %v474, 4
      %v477 = vshll.u32 %v179, 16
      %v479 = vrot.slane %v477, 5
      %v480 = vsel %vm202, %v475, %v479
      %v481 = vshrl.u32 %v179, 16
      %v483 = vrot.slane %v481, 4
      %v484 = vor.u32 %v483, %v479
      %v485 = vrot.slane %v484, 4
      %v487 = vshll.u32 %v180, 16
      %v489 = vrot.slane %v487, 5
      %v490 = vsel %vm202, %v485, %v489
      %v492 = vshrl.u32 %v181, 16
      %v494 = vrot.slane %v492, 4
      %v495 = vshll.u32 %v181, 16
      %v497 = vrot.slane %v495, 5
      %v498 = vor.u32 %v494, %v497
      %v499 = vrot.slane %v498, 4
      %v501 = vshll.u32 %v182, 16
      %v503 = vrot.slane %v501, 5
      %v504 = vsel %vm202, %v499, %v503
      %v505 = vshrl.u32 %v182, 16
      %v507 = vrot.slane %v505, 4
      %v508 = vor.u32 %v507, %v503
      %v509 = vrot.slane %v508, 4
      %v511 = vshll.u32 %v183, 16
      %v513 = vrot.slane %v511, 5
      %v514 = vsel %vm202, %v509, %v513
      %v516 = vshrl.u32 %v184, 16
      %v518 = vrot.slane %v516, 4
      %v519 = vshll.u32 %v184, 16
      %v521 = vrot.slane %v519, 5
      %v522 = vor.u32 %v518, %v521
      %v523 = vrot.slane %v522, 4
      %v525 = vshll.u32 %v185, 16
      %v527 = vrot.slane %v525, 5
      %v528 = vsel %vm202, %v523, %v527
      %v529 = vshrl.u32 %v185, 16
      %v531 = vrot.slane %v529, 4
      %v532 = vor.u32 %v531, %v527
      %v533 = vrot.slane %v532, 4
      %v535 = vshll.u32 %v186, 16
      %v537 = vrot.slane %v535, 5
      %v538 = vsel %vm202, %v533, %v537
      %v540 = vshrl.u32 %v187, 16
      %v542 = vrot.slane %v540, 4
      %v543 = vshll.u32 %v187, 16
      %v545 = vrot.slane %v543, 5
      %v546 = vor.u32 %v542, %v545
      %v547 = vrot.slane %v546, 4
      %v549 = vshll.u32 %v188, 16
      %v551 = vrot.slane %v549, 5
      %v552 = vsel %vm202, %v547, %v551
      %v553 = vshrl.u32 %v188, 16
      %v555 = vrot.slane %v553, 4
      %v556 = vor.u32 %v555, %v551
      %v557 = vrot.slane %v556, 4
      %v559 = vshll.u32 %v189, 16
      %v561 = vrot.slane %v559, 5
      %v562 = vsel %vm202, %v557, %v561
      %v564 = vshrl.u32 %v190, 16
      %v566 = vrot.slane %v564, 4
      %v567 = vshll.u32 %v190, 16
      %v569 = vrot.slane %v567, 5
      %v570 = vor.u32 %v566, %v569
      %v571 = vrot.slane %v570, 4
      %v573 = vshll.u32 %v191, 16
      %v575 = vrot.slane %v573, 5
      %v576 = vsel %vm202, %v571, %v575
      %v577 = vshrl.u32 %v191, 16
      %v579 = vrot.slane %v577, 4
      %v580 = vor.u32 %v579, %v575
      %v581 = vrot.slane %v580, 4
      %v583 = vshll.u32 %v192, 16
      %v585 = vrot.slane %v583, 5
      %v586 = vsel %vm202, %v581, %v585
      %s587 = scalar_lea.vmem %s1, 2
      %v588 = vld [vmem:[%s587] sm:$0x3]
      %v589 = vunpack.c.l.b16 %v216
      %v590 = vunpack.c.l.b16 %v226
      %v591 = vunpack.c.l.b16 %v240
      %v592 = vunpack.c.l.b16 %v250
      %v593 = vunpack.c.l.b16 %v264
      %v594 = vunpack.c.l.b16 %v274
      %v595 = vunpack.c.l.b16 %v288
      %v596 = vunpack.c.l.b16 %v298
      %v597 = vunpack.c.l.b16 %v312
      %v598 = vunpack.c.l.b16 %v322
      %v599 = vunpack.c.l.b16 %v336
      %v600 = vunpack.c.l.b16 %v346
      %v601 = vunpack.c.l.b16 %v360
      %v602 = vunpack.c.l.b16 %v370
      %v603 = vunpack.c.l.b16 %v384
      %v604 = vunpack.c.l.b16 %v394
      %v605 = vunpack.c.l.b16 %v408
      %v606 = vunpack.c.l.b16 %v418
      %v607 = vunpack.c.l.b16 %v432
      %v608 = vunpack.c.l.b16 %v442
      %v609 = vunpack.c.l.b16 %v456
      %v610 = vunpack.c.l.b16 %v466
      %v611 = vunpack.c.l.b16 %v480
      %v612 = vunpack.c.l.b16 %v490
      %v613 = vunpack.c.l.b16 %v504
      %v614 = vunpack.c.l.b16 %v514
      %v615 = vunpack.c.l.b16 %v528
      %v616 = vunpack.c.l.b16 %v538
      %v617 = vunpack.c.l.b16 %v552
      %v618 = vunpack.c.l.b16 %v562
      %v619 = vunpack.c.l.b16 %v576
      %v620 = vunpack.c.l.b16 %v586
      %v621 = vpack.c.b16 %v590, %v589
      %v622 = vpack.c.b16 %v592, %v591
      %v623 = vpack.c.b16 %v594, %v593
      %v624 = vpack.c.b16 %v596, %v595
      %v625 = vpack.c.b16 %v598, %v597
      %v626 = vpack.c.b16 %v600, %v599
      %v627 = vpack.c.b16 %v602, %v601
      %v628 = vpack.c.b16 %v604, %v603
      %v629 = vpack.c.b16 %v606, %v605
      %v630 = vpack.c.b16 %v608, %v607
      %v631 = vpack.c.b16 %v610, %v609
      %v632 = vpack.c.b16 %v612, %v611
      %v633 = vpack.c.b16 %v614, %v613
      %v634 = vpack.c.b16 %v616, %v615
      %v635 = vpack.c.b16 %v618, %v617
      %v636 = vpack.c.b16 %v620, %v619
      %vm637 = vcmask 31744
      %v639 = vsel %vm637, %v621, 0
      %v642 = vsel %vm637, %v622, 0
      %v645 = vsel %vm637, %v623, 0
      %v648 = vsel %vm637, %v624, 0
      %v651 = vsel %vm637, %v625, 0
      %v654 = vsel %vm637, %v626, 0
      %v657 = vsel %vm637, %v627, 0
      %v660 = vsel %vm637, %v628, 0
      %v663 = vsel %vm637, %v629, 0
      %v666 = vsel %vm637, %v630, 0
      %v669 = vsel %vm637, %v631, 0
      %v672 = vsel %vm637, %v632, 0
      %v675 = vsel %vm637, %v633, 0
      %v678 = vsel %vm637, %v634, 0
      %v681 = vsel %vm637, %v635, 0
      %v684 = vsel %vm637, %v636, 0
      %vm686 = vcmask 1041408
      %v688 = vsel %vm686, %v588, 0
      %690 = vmatprep.subr.bf16.mxu0 0
      %691 = vmatpush1.bf16.msra.mxu0 %v688
      %692 = vmatprep.subr.bf16.mxu0 0
      %693 = vmatpush1.bf16.msra.mxu0 0
      %694 = vmatprep.subr.bf16.mxu0 0
      %695 = vmatpush1.bf16.msra.mxu0 0
      %696 = vmatprep.subr.bf16.mxu0 0
      %697 = vmatpush1.bf16.msra.mxu0 0
      %698 = vmatprep.subr.bf16.mxu0 0
      %699 = vmatpush1.bf16.msra.mxu0 0
      %700 = vmatprep.subr.bf16.mxu0 0
      %701 = vmatpush1.bf16.msra.mxu0 0
      %702 = vmatprep.subr.bf16.mxu0 0
      %703 = vmatpush1.bf16.msra.mxu0 0
      %704 = vmatprep.subr.bf16.mxu0 0
      %705 = vmatpush1.bf16.msra.mxu0 0
      %706 = vmatprep.subr.bf16.mxu0 0
      %707 = vmatpush1.bf16.msra.mxu0 0
      %708 = vmatprep.subr.bf16.mxu0 0
      %709 = vmatpush1.bf16.msra.mxu0 0
      %710 = vmatprep.subr.bf16.mxu0 0
      %711 = vmatpush1.bf16.msra.mxu0 0
      %712 = vmatprep.subr.bf16.mxu0 0
      %713 = vmatpush1.bf16.msra.mxu0 0
      %714 = vmatprep.subr.bf16.mxu0 0
      %715 = vmatpush1.bf16.msra.mxu0 0
      %716 = vmatprep.subr.bf16.mxu0 0
      %717 = vmatpush1.bf16.msra.mxu0 0
      %718 = vmatprep.subr.bf16.mxu0 0
      %719 = vmatpush1.bf16.msra.mxu0 0
      %720 = vmatprep.subr.bf16.mxu0 0
      %721 = vmatpush1.bf16.msra.mxu0 0
      %722 = vmatprep.mubr.bf16.mxu0 0
      %723 = vmatmul.mubr.bf16.gmra.mrb[0].mxu0 %v639
      %v724 = vpop.f32.mrb[0].mxu0
      %v725 = vadd.f32 0.0, %v724
      %v726 = vpop.f32.mrb[0].mxu0
      %v727 = vpop.f32.mrb[0].mxu0
      %v728 = vadd.f32 0.0, %v727
      %v729 = vpop.f32.mrb[0].mxu0
      %730 = vmatprep.mubr.bf16.mxu0 0
      %731 = vmatmul.mubr.bf16.gmra.mrb[0].mxu0 %v642
      %v732 = vpop.f32.mrb[0].mxu0
      %v733 = vadd.f32 0.0, %v732
      %v734 = vpop.f32.mrb[0].mxu0
      %v735 = vpop.f32.mrb[0].mxu0
      %v736 = vadd.f32 0.0, %v735
      %v737 = vpop.f32.mrb[0].mxu0
      %738 = vmatprep.mubr.bf16.mxu0 0
      %739 = vmatmul.mubr.bf16.gmra.mrb[0].mxu0 %v645
      %v740 = vpop.f32.mrb[0].mxu0
      %v741 = vadd.f32 0.0, %v740
      %v742 = vpop.f32.mrb[0].mxu0
      %v743 = vpop.f32.mrb[0].mxu0
      %v744 = vadd.f32 0.0, %v743
      %v745 = vpop.f32.mrb[0].mxu0
      %746 = vmatprep.mubr.bf16.mxu0 0
      %747 = vmatmul.mubr.bf16.gmra.mrb[0].mxu0 %v648
      %v748 = vpop.f32.mrb[0].mxu0
      %v749 = vadd.f32 0.0, %v748
      %v750 = vpop.f32.mrb[0].mxu0
      %v751 = vpop.f32.mrb[0].mxu0
      %v752 = vadd.f32 0.0, %v751
      %v753 = vpop.f32.mrb[0].mxu0
      %754 = vmatprep.mubr.bf16.mxu0 0
      %755 = vmatmul.mubr.bf16.gmra.mrb[0].mxu0 %v651
      %v756 = vpop.f32.mrb[0].mxu0
      %v757 = vadd.f32 0.0, %v756
      %v758 = vpop.f32.mrb[0].mxu0
      %v759 = vpop.f32.mrb[0].mxu0
      %v760 = vadd.f32 0.0, %v759
      %v761 = vpop.f32.mrb[0].mxu0
      %762 = vmatprep.mubr.bf16.mxu0 0
      %763 = vmatmul.mubr.bf16.gmra.mrb[0].mxu0 %v654
      %v764 = vpop.f32.mrb[0].mxu0
      %v765 = vadd.f32 0.0, %v764
      %v766 = vpop.f32.mrb[0].mxu0
      %v767 = vpop.f32.mrb[0].mxu0
      %v768 = vadd.f32 0.0, %v767
      %v769 = vpop.f32.mrb[0].mxu0
      %770 = vmatprep.mubr.bf16.mxu0 0
      %771 = vmatmul.mubr.bf16.gmra.mrb[0].mxu0 %v657
      %v772 = vpop.f32.mrb[0].mxu0
      %v773 = vadd.f32 0.0, %v772
      %v774 = vpop.f32.mrb[0].mxu0
      %v775 = vpop.f32.mrb[0].mxu0
      %v776 = vadd.f32 0.0, %v775
      %v777 = vpop.f32.mrb[0].mxu0
      %778 = vmatprep.mubr.bf16.mxu0 0
      %779 = vmatmul.mubr.bf16.gmra.mrb[0].mxu0 %v660
      %v780 = vpop.f32.mrb[0].mxu0
      %v781 = vadd.f32 0.0, %v780
      %v782 = vpop.f32.mrb[0].mxu0
      %v783 = vpop.f32.mrb[0].mxu0
      %v784 = vadd.f32 0.0, %v783
      %v785 = vpop.f32.mrb[0].mxu0
      %786 = vmatprep.mubr.bf16.mxu0 0
      %787 = vmatmul.mubr.bf16.gmra.mrb[0].mxu0 %v663
      %v788 = vpop.f32.mrb[0].mxu0
      %v789 = vadd.f32 0.0, %v788
      %v790 = vpop.f32.mrb[0].mxu0
      %v791 = vpop.f32.mrb[0].mxu0
      %v792 = vadd.f32 0.0, %v791
      %v793 = vpop.f32.mrb[0].mxu0
      %794 = vmatprep.mubr.bf16.mxu0 0
      %795 = vmatmul.mubr.bf16.gmra.mrb[0].mxu0 %v666
      %v796 = vpop.f32.mrb[0].mxu0
      %v797 = vadd.f32 0.0, %v796
      %v798 = vpop.f32.mrb[0].mxu0
      %v799 = vpop.f32.mrb[0].mxu0
      %v800 = vadd.f32 0.0, %v799
      %v801 = vpop.f32.mrb[0].mxu0
      %802 = vmatprep.mubr.bf16.mxu0 0
      %803 = vmatmul.mubr.bf16.gmra.mrb[0].mxu0 %v669
      %v804 = vpop.f32.mrb[0].mxu0
      %v805 = vadd.f32 0.0, %v804
      %v806 = vpop.f32.mrb[0].mxu0
      %v807 = vpop.f32.mrb[0].mxu0
      %v808 = vadd.f32 0.0, %v807
      %v809 = vpop.f32.mrb[0].mxu0
      %810 = vmatprep.mubr.bf16.mxu0 0
      %811 = vmatmul.mubr.bf16.gmra.mrb[0].mxu0 %v672
      %v812 = vpop.f32.mrb[0].mxu0
      %v813 = vadd.f32 0.0, %v812
      %v814 = vpop.f32.mrb[0].mxu0
      %v815 = vpop.f32.mrb[0].mxu0
      %v816 = vadd.f32 0.0, %v815
      %v817 = vpop.f32.mrb[0].mxu0
      %818 = vmatprep.mubr.bf16.mxu0 0
      %819 = vmatmul.mubr.bf16.gmra.mrb[0].mxu0 %v675
      %v820 = vpop.f32.mrb[0].mxu0
      %v821 = vadd.f32 0.0, %v820
      %v822 = vpop.f32.mrb[0].mxu0
      %v823 = vpop.f32.mrb[0].mxu0
      %v824 = vadd.f32 0.0, %v823
      %v825 = vpop.f32.mrb[0].mxu0
      %826 = vmatprep.mubr.bf16.mxu0 0
      %827 = vmatmul.mubr.bf16.gmra.mrb[0].mxu0 %v678
      %v828 = vpop.f32.mrb[0].mxu0
      %v829 = vadd.f32 0.0, %v828
      %v830 = vpop.f32.mrb[0].mxu0
      %v831 = vpop.f32.mrb[0].mxu0
      %v832 = vadd.f32 0.0, %v831
      %v833 = vpop.f32.mrb[0].mxu0
      %834 = vmatprep.mubr.bf16.mxu0 0
      %835 = vmatmul.mubr.bf16.gmra.mrb[0].mxu0 %v681
      %v836 = vpop.f32.mrb[0].mxu0
      %v837 = vadd.f32 0.0, %v836
      %v838 = vpop.f32.mrb[0].mxu0
      %v839 = vpop.f32.mrb[0].mxu0
      %v840 = vadd.f32 0.0, %v839
      %v841 = vpop.f32.mrb[0].mxu0
      %842 = vmatprep.mubr.bf16.mxu0 0
      %843 = vmatmul.mubr.bf16.gmra.mrb[0].mxu0 %v684
      %v844 = vpop.f32.mrb[0].mxu0
      %v845 = vadd.f32 0.0, %v844
      %v846 = vpop.f32.mrb[0].mxu0
      %v847 = vpop.f32.mrb[0].mxu0
      %v848 = vadd.f32 0.0, %v847
      %v849 = vpop.f32.mrb[0].mxu0
      %850 = vdwg.mxu0
      %v883 = vunpack.c.l.b16 %v145
      %v884 = vunpack.c.l.b16 %v146
      %v885 = vunpack.c.l.b16 %v148
      %v886 = vunpack.c.l.b16 %v149
      %v887 = vunpack.c.l.b16 %v151
      %v888 = vunpack.c.l.b16 %v152
      %v889 = vunpack.c.l.b16 %v154
      %v890 = vunpack.c.l.b16 %v155
      %v891 = vunpack.c.l.b16 %v157
      %v892 = vunpack.c.l.b16 %v158
      %v893 = vunpack.c.l.b16 %v160
      %v894 = vunpack.c.l.b16 %v161
      %v895 = vunpack.c.l.b16 %v163
      %v896 = vunpack.c.l.b16 %v164
      %v897 = vunpack.c.l.b16 %v166
      %v898 = vunpack.c.l.b16 %v167
      %v899 = vunpack.c.l.b16 %v169
      %v900 = vunpack.c.l.b16 %v170
      %v901 = vunpack.c.l.b16 %v172
      %v902 = vunpack.c.l.b16 %v173
      %v903 = vunpack.c.l.b16 %v175
      %v904 = vunpack.c.l.b16 %v176
      %v905 = vunpack.c.l.b16 %v178
      %v906 = vunpack.c.l.b16 %v179
      %v907 = vunpack.c.l.b16 %v181
      %v908 = vunpack.c.l.b16 %v182
      %v909 = vunpack.c.l.b16 %v184
      %v910 = vunpack.c.l.b16 %v185
      %v911 = vunpack.c.l.b16 %v187
      %v912 = vunpack.c.l.b16 %v188
      %v913 = vunpack.c.l.b16 %v190
      %v914 = vunpack.c.l.b16 %v191
      %v915 = vpack.c.b16 %v884, %v883
      %v916 = vpack.c.b16 %v886, %v885
      %v917 = vpack.c.b16 %v888, %v887
      %v918 = vpack.c.b16 %v890, %v889
      %v919 = vpack.c.b16 %v892, %v891
      %v920 = vpack.c.b16 %v894, %v893
      %v921 = vpack.c.b16 %v896, %v895
      %v922 = vpack.c.b16 %v898, %v897
      %v923 = vpack.c.b16 %v900, %v899
      %v924 = vpack.c.b16 %v902, %v901
      %v925 = vpack.c.b16 %v904, %v903
      %v926 = vpack.c.b16 %v906, %v905
      %v927 = vpack.c.b16 %v908, %v907
      %v928 = vpack.c.b16 %v910, %v909
      %v929 = vpack.c.b16 %v912, %v911
      %v930 = vpack.c.b16 %v914, %v913
      %v932 = vsel %vm637, %v915, 0
      %v935 = vsel %vm637, %v916, 0
      %v938 = vsel %vm637, %v917, 0
      %v941 = vsel %vm637, %v918, 0
      %v944 = vsel %vm637, %v919, 0
      %v947 = vsel %vm637, %v920, 0
      %v950 = vsel %vm637, %v921, 0
      %v953 = vsel %vm637, %v922, 0
      %v956 = vsel %vm637, %v923, 0
      %v959 = vsel %vm637, %v924, 0
      %v962 = vsel %vm637, %v925, 0
      %v965 = vsel %vm637, %v926, 0
      %v968 = vsel %vm637, %v927, 0
      %v971 = vsel %vm637, %v928, 0
      %v974 = vsel %vm637, %v929, 0
      %v977 = vsel %vm637, %v930, 0
      %v980 = vsel %vm686, %v199, 0
      %982 = vmatprep.subr.bf16.mxu0 0
      %983 = vmatpush1.bf16.msra.mxu0 %v980
      %984 = vmatprep.subr.bf16.mxu0 0
      %985 = vmatpush1.bf16.msra.mxu0 0
      %986 = vmatprep.subr.bf16.mxu0 0
      %987 = vmatpush1.bf16.msra.mxu0 0
      %988 = vmatprep.subr.bf16.mxu0 0
      %989 = vmatpush1.bf16.msra.mxu0 0
      %990 = vmatprep.subr.bf16.mxu0 0
      %991 = vmatpush1.bf16.msra.mxu0 0
      %992 = vmatprep.subr.bf16.mxu0 0
      %993 = vmatpush1.bf16.msra.mxu0 0
      %994 = vmatprep.subr.bf16.mxu0 0
      %995 = vmatpush1.bf16.msra.mxu0 0
      %996 = vmatprep.subr.bf16.mxu0 0
      %997 = vmatpush1.bf16.msra.mxu0 0
      %998 = vmatprep.subr.bf16.mxu0 0
      %999 = vmatpush1.bf16.msra.mxu0 0
      %1000 = vmatprep.subr.bf16.mxu0 0
      %1001 = vmatpush1.bf16.msra.mxu0 0
      %1002 = vmatprep.subr.bf16.mxu0 0
      %1003 = vmatpush1.bf16.msra.mxu0 0
      %1004 = vmatprep.subr.bf16.mxu0 0
      %1005 = vmatpush1.bf16.msra.mxu0 0
      %1006 = vmatprep.subr.bf16.mxu0 0
      %1007 = vmatpush1.bf16.msra.mxu0 0
      %1008 = vmatprep.subr.bf16.mxu0 0
      %1009 = vmatpush1.bf16.msra.mxu0 0
      %1010 = vmatprep.subr.bf16.mxu0 0
      %1011 = vmatpush1.bf16.msra.mxu0 0
      %1012 = vmatprep.subr.bf16.mxu0 0
      %1013 = vmatpush1.bf16.msra.mxu0 0
      %1014 = vmatprep.mubr.bf16.mxu0 0
      %1015 = vmatmul.mubr.bf16.gmra.mrb[0].mxu0 %v932
      %v1016 = vpop.f32.mrb[0].mxu0
      %v1017 = vadd.f32 %v725, %v1016
      %v1018 = vpop.f32.mrb[0].mxu0
      %v1019 = vpop.f32.mrb[0].mxu0
      %v1020 = vadd.f32 %v728, %v1019
      %v1021 = vpop.f32.mrb[0].mxu0
      %1022 = vmatprep.mubr.bf16.mxu0 0
      %1023 = vmatmul.mubr.bf16.gmra.mrb[0].mxu0 %v935
      %v1024 = vpop.f32.mrb[0].mxu0
      %v1025 = vadd.f32 %v733, %v1024
      %v1026 = vpop.f32.mrb[0].mxu0
      %v1027 = vpop.f32.mrb[0].mxu0
      %v1028 = vadd.f32 %v736, %v1027
      %v1029 = vpop.f32.mrb[0].mxu0
      %1030 = vmatprep.mubr.bf16.mxu0 0
      %1031 = vmatmul.mubr.bf16.gmra.mrb[0].mxu0 %v938
      %v1032 = vpop.f32.mrb[0].mxu0
      %v1033 = vadd.f32 %v741, %v1032
      %v1034 = vpop.f32.mrb[0].mxu0
      %v1035 = vpop.f32.mrb[0].mxu0
      %v1036 = vadd.f32 %v744, %v1035
      %v1037 = vpop.f32.mrb[0].mxu0
      %1038 = vmatprep.mubr.bf16.mxu0 0
      %1039 = vmatmul.mubr.bf16.gmra.mrb[0].mxu0 %v941
      %v1040 = vpop.f32.mrb[0].mxu0
      %v1041 = vadd.f32 %v749, %v1040
      %v1042 = vpop.f32.mrb[0].mxu0
      %v1043 = vpop.f32.mrb[0].mxu0
      %v1044 = vadd.f32 %v752, %v1043
      %v1045 = vpop.f32.mrb[0].mxu0
      %1046 = vmatprep.mubr.bf16.mxu0 0
      %1047 = vmatmul.mubr.bf16.gmra.mrb[0].mxu0 %v944
      %v1048 = vpop.f32.mrb[0].mxu0
      %v1049 = vadd.f32 %v757, %v1048
      %v1050 = vpop.f32.mrb[0].mxu0
      %v1051 = vpop.f32.mrb[0].mxu0
      %v1052 = vadd.f32 %v760, %v1051
      %v1053 = vpop.f32.mrb[0].mxu0
      %1054 = vmatprep.mubr.bf16.mxu0 0
      %1055 = vmatmul.mubr.bf16.gmra.mrb[0].mxu0 %v947
      %v1056 = vpop.f32.mrb[0].mxu0
      %v1057 = vadd.f32 %v765, %v1056
      %v1058 = vpop.f32.mrb[0].mxu0
      %v1059 = vpop.f32.mrb[0].mxu0
      %v1060 = vadd.f32 %v768, %v1059
      %v1061 = vpop.f32.mrb[0].mxu0
      %1062 = vmatprep.mubr.bf16.mxu0 0
      %1063 = vmatmul.mubr.bf16.gmra.mrb[0].mxu0 %v950
      %v1064 = vpop.f32.mrb[0].mxu0
      %v1065 = vadd.f32 %v773, %v1064
      %v1066 = vpop.f32.mrb[0].mxu0
      %v1067 = vpop.f32.mrb[0].mxu0
      %v1068 = vadd.f32 %v776, %v1067
      %v1069 = vpop.f32.mrb[0].mxu0
      %1070 = vmatprep.mubr.bf16.mxu0 0
      %1071 = vmatmul.mubr.bf16.gmra.mrb[0].mxu0 %v953
      %v1072 = vpop.f32.mrb[0].mxu0
      %v1073 = vadd.f32 %v781, %v1072
      %v1074 = vpop.f32.mrb[0].mxu0
      %v1075 = vpop.f32.mrb[0].mxu0
      %v1076 = vadd.f32 %v784, %v1075
      %v1077 = vpop.f32.mrb[0].mxu0
      %1078 = vmatprep.mubr.bf16.mxu0 0
      %1079 = vmatmul.mubr.bf16.gmra.mrb[0].mxu0 %v956
      %v1080 = vpop.f32.mrb[0].mxu0
      %v1081 = vadd.f32 %v789, %v1080
      %v1082 = vpop.f32.mrb[0].mxu0
      %v1083 = vpop.f32.mrb[0].mxu0
      %v1084 = vadd.f32 %v792, %v1083
      %v1085 = vpop.f32.mrb[0].mxu0
      %1086 = vmatprep.mubr.bf16.mxu0 0
      %1087 = vmatmul.mubr.bf16.gmra.mrb[0].mxu0 %v959
      %v1088 = vpop.f32.mrb[0].mxu0
      %v1089 = vadd.f32 %v797, %v1088
      %v1090 = vpop.f32.mrb[0].mxu0
      %v1091 = vpop.f32.mrb[0].mxu0
      %v1092 = vadd.f32 %v800, %v1091
      %v1093 = vpop.f32.mrb[0].mxu0
      %1094 = vmatprep.mubr.bf16.mxu0 0
      %1095 = vmatmul.mubr.bf16.gmra.mrb[0].mxu0 %v962
      %v1096 = vpop.f32.mrb[0].mxu0
      %v1097 = vadd.f32 %v805, %v1096
      %v1098 = vpop.f32.mrb[0].mxu0
      %v1099 = vpop.f32.mrb[0].mxu0
      %v1100 = vadd.f32 %v808, %v1099
      %v1101 = vpop.f32.mrb[0].mxu0
      %1102 = vmatprep.mubr.bf16.mxu0 0
      %1103 = vmatmul.mubr.bf16.gmra.mrb[0].mxu0 %v965
      %v1104 = vpop.f32.mrb[0].mxu0
      %v1105 = vadd.f32 %v813, %v1104
      %v1106 = vpop.f32.mrb[0].mxu0
      %v1107 = vpop.f32.mrb[0].mxu0
      %v1108 = vadd.f32 %v816, %v1107
      %v1109 = vpop.f32.mrb[0].mxu0
      %1110 = vmatprep.mubr.bf16.mxu0 0
      %1111 = vmatmul.mubr.bf16.gmra.mrb[0].mxu0 %v968
      %v1112 = vpop.f32.mrb[0].mxu0
      %v1113 = vadd.f32 %v821, %v1112
      %v1114 = vpop.f32.mrb[0].mxu0
      %v1115 = vpop.f32.mrb[0].mxu0
      %v1116 = vadd.f32 %v824, %v1115
      %v1117 = vpop.f32.mrb[0].mxu0
      %1118 = vmatprep.mubr.bf16.mxu0 0
      %1119 = vmatmul.mubr.bf16.gmra.mrb[0].mxu0 %v971
      %v1120 = vpop.f32.mrb[0].mxu0
      %v1121 = vadd.f32 %v829, %v1120
      %v1122 = vpop.f32.mrb[0].mxu0
      %v1123 = vpop.f32.mrb[0].mxu0
      %v1124 = vadd.f32 %v832, %v1123
      %v1125 = vpop.f32.mrb[0].mxu0
      %1126 = vmatprep.mubr.bf16.mxu0 0
      %1127 = vmatmul.mubr.bf16.gmra.mrb[0].mxu0 %v974
      %v1128 = vpop.f32.mrb[0].mxu0
      %v1129 = vadd.f32 %v837, %v1128
      %v1130 = vpop.f32.mrb[0].mxu0
      %v1131 = vpop.f32.mrb[0].mxu0
      %v1132 = vadd.f32 %v840, %v1131
      %v1133 = vpop.f32.mrb[0].mxu0
      %1134 = vmatprep.mubr.bf16.mxu0 0
      %1135 = vmatmul.mubr.bf16.gmra.mrb[0].mxu0 %v977
      %v1136 = vpop.f32.mrb[0].mxu0
      %v1137 = vadd.f32 %v845, %v1136
      %v1138 = vpop.f32.mrb[0].mxu0
      %v1139 = vpop.f32.mrb[0].mxu0
      %v1140 = vadd.f32 %v848, %v1139
      %v1141 = vpop.f32.mrb[0].mxu0
      %1142 = vdwg.mxu0
      %vm1159 = vcmask 1042432
      %vm1160 = vcmask 1046532
      %vm1161 = vmor %vm1159, %vm1160
      %v1162 = vrot.slane %v145, 5
      %v1163 = vrot.slane %v1162, 4
      %v1164 = vrot.slane %v146, 5
      %v1165 = vsel %vm1161, %v1163, %v1164
      %v1166 = vrot.slane %v1164, 4
      %v1167 = vrot.slane %v147, 5
      %v1168 = vsel %vm1161, %v1166, %v1167
      %v1169 = vrot.slane %v148, 5
      %v1170 = vrot.slane %v1169, 4
      %v1171 = vrot.slane %v149, 5
      %v1172 = vsel %vm1161, %v1170, %v1171
      %v1173 = vrot.slane %v1171, 4
      %v1174 = vrot.slane %v150, 5
      %v1175 = vsel %vm1161, %v1173, %v1174
      %v1176 = vrot.slane %v151, 5
      %v1177 = vrot.slane %v1176, 4
      %v1178 = vrot.slane %v152, 5
      %v1179 = vsel %vm1161, %v1177, %v1178
      %v1180 = vrot.slane %v1178, 4
      %v1181 = vrot.slane %v153, 5
      %v1182 = vsel %vm1161, %v1180, %v1181
      %v1183 = vrot.slane %v154, 5
      %v1184 = vrot.slane %v1183, 4
      %v1185 = vrot.slane %v155, 5
      %v1186 = vsel %vm1161, %v1184, %v1185
      %v1187 = vrot.slane %v1185, 4
      %v1188 = vrot.slane %v156, 5
      %v1189 = vsel %vm1161, %v1187, %v1188
      %v1190 = vrot.slane %v157, 5
      %v1191 = vrot.slane %v1190, 4
      %v1192 = vrot.slane %v158, 5
      %v1193 = vsel %vm1161, %v1191, %v1192
      %v1194 = vrot.slane %v1192, 4
      %v1195 = vrot.slane %v159, 5
      %v1196 = vsel %vm1161, %v1194, %v1195
      %v1197 = vrot.slane %v160, 5
      %v1198 = vrot.slane %v1197, 4
      %v1199 = vrot.slane %v161, 5
      %v1200 = vsel %vm1161, %v1198, %v1199
      %v1201 = vrot.slane %v1199, 4
      %v1202 = vrot.slane %v162, 5
      %v1203 = vsel %vm1161, %v1201, %v1202
      %v1204 = vrot.slane %v163, 5
      %v1205 = vrot.slane %v1204, 4
      %v1206 = vrot.slane %v164, 5
      %v1207 = vsel %vm1161, %v1205, %v1206
      %v1208 = vrot.slane %v1206, 4
      %v1209 = vrot.slane %v165, 5
      %v1210 = vsel %vm1161, %v1208, %v1209
      %v1211 = vrot.slane %v166, 5
      %v1212 = vrot.slane %v1211, 4
      %v1213 = vrot.slane %v167, 5
      %v1214 = vsel %vm1161, %v1212, %v1213
      %v1215 = vrot.slane %v1213, 4
      %v1216 = vrot.slane %v168, 5
      %v1217 = vsel %vm1161, %v1215, %v1216
      %v1218 = vrot.slane %v169, 5
      %v1219 = vrot.slane %v1218, 4
      %v1220 = vrot.slane %v170, 5
      %v1221 = vsel %vm1161, %v1219, %v1220
      %v1222 = vrot.slane %v1220, 4
      %v1223 = vrot.slane %v171, 5
      %v1224 = vsel %vm1161, %v1222, %v1223
      %v1225 = vrot.slane %v172, 5
      %v1226 = vrot.slane %v1225, 4
      %v1227 = vrot.slane %v173, 5
      %v1228 = vsel %vm1161, %v1226, %v1227
      %v1229 = vrot.slane %v1227, 4
      %v1230 = vrot.slane %v174, 5
      %v1231 = vsel %vm1161, %v1229, %v1230
      %v1232 = vrot.slane %v175, 5
      %v1233 = vrot.slane %v1232, 4
      %v1234 = vrot.slane %v176, 5
      %v1235 = vsel %vm1161, %v1233, %v1234
      %v1236 = vrot.slane %v1234, 4
      %v1237 = vrot.slane %v177, 5
      %v1238 = vsel %vm1161, %v1236, %v1237
      %v1239 = vrot.slane %v178, 5
      %v1240 = vrot.slane %v1239, 4
      %v1241 = vrot.slane %v179, 5
      %v1242 = vsel %vm1161, %v1240, %v1241
      %v1243 = vrot.slane %v1241, 4
      %v1244 = vrot.slane %v180, 5
      %v1245 = vsel %vm1161, %v1243, %v1244
      %v1246 = vrot.slane %v181, 5
      %v1247 = vrot.slane %v1246, 4
      %v1248 = vrot.slane %v182, 5
      %v1249 = vsel %vm1161, %v1247, %v1248
      %v1250 = vrot.slane %v1248, 4
      %v1251 = vrot.slane %v183, 5
      %v1252 = vsel %vm1161, %v1250, %v1251
      %v1253 = vrot.slane %v184, 5
      %v1254 = vrot.slane %v1253, 4
      %v1255 = vrot.slane %v185, 5
      %v1256 = vsel %vm1161, %v1254, %v1255
      %v1257 = vrot.slane %v1255, 4
      %v1258 = vrot.slane %v186, 5
      %v1259 = vsel %vm1161, %v1257, %v1258
      %v1260 = vrot.slane %v187, 5
      %v1261 = vrot.slane %v1260, 4
      %v1262 = vrot.slane %v188, 5
      %v1263 = vsel %vm1161, %v1261, %v1262
      %v1264 = vrot.slane %v1262, 4
      %v1265 = vrot.slane %v189, 5
      %v1266 = vsel %vm1161, %v1264, %v1265
      %v1267 = vrot.slane %v190, 5
      %v1268 = vrot.slane %v1267, 4
      %v1269 = vrot.slane %v191, 5
      %v1270 = vsel %vm1161, %v1268, %v1269
      %v1271 = vrot.slane %v1269, 4
      %v1272 = vrot.slane %v192, 5
      %v1273 = vsel %vm1161, %v1271, %v1272
      %s1274 = scalar_lea.vmem %s1, 4
      %v1275 = vld [vmem:[%s1274] sm:$0x3]
      %v1276 = vunpack.c.l.b16 %v1165
      %v1277 = vunpack.c.l.b16 %v1168
      %v1278 = vunpack.c.l.b16 %v1172
      %v1279 = vunpack.c.l.b16 %v1175
      %v1280 = vunpack.c.l.b16 %v1179
      %v1281 = vunpack.c.l.b16 %v1182
      %v1282 = vunpack.c.l.b16 %v1186
      %v1283 = vunpack.c.l.b16 %v1189
      %v1284 = vunpack.c.l.b16 %v1193
      %v1285 = vunpack.c.l.b16 %v1196
      %v1286 = vunpack.c.l.b16 %v1200
      %v1287 = vunpack.c.l.b16 %v1203
      %v1288 = vunpack.c.l.b16 %v1207
      %v1289 = vunpack.c.l.b16 %v1210
      %v1290 = vunpack.c.l.b16 %v1214
      %v1291 = vunpack.c.l.b16 %v1217
      %v1292 = vunpack.c.l.b16 %v1221
      %v1293 = vunpack.c.l.b16 %v1224
      %v1294 = vunpack.c.l.b16 %v1228
      %v1295 = vunpack.c.l.b16 %v1231
      %v1296 = vunpack.c.l.b16 %v1235
      %v1297 = vunpack.c.l.b16 %v1238
      %v1298 = vunpack.c.l.b16 %v1242
      %v1299 = vunpack.c.l.b16 %v1245
      %v1300 = vunpack.c.l.b16 %v1249
      %v1301 = vunpack.c.l.b16 %v1252
      %v1302 = vunpack.c.l.b16 %v1256
      %v1303 = vunpack.c.l.b16 %v1259
      %v1304 = vunpack.c.l.b16 %v1263
      %v1305 = vunpack.c.l.b16 %v1266
      %v1306 = vunpack.c.l.b16 %v1270
      %v1307 = vunpack.c.l.b16 %v1273
      %v1308 = vpack.c.b16 %v1277, %v1276
      %v1309 = vpack.c.b16 %v1279, %v1278
      %v1310 = vpack.c.b16 %v1281, %v1280
      %v1311 = vpack.c.b16 %v1283, %v1282
      %v1312 = vpack.c.b16 %v1285, %v1284
      %v1313 = vpack.c.b16 %v1287, %v1286
      %v1314 = vpack.c.b16 %v1289, %v1288
      %v1315 = vpack.c.b16 %v1291, %v1290
      %v1316 = vpack.c.b16 %v1293, %v1292
      %v1317 = vpack.c.b16 %v1295, %v1294
      %v1318 = vpack.c.b16 %v1297, %v1296
      %v1319 = vpack.c.b16 %v1299, %v1298
      %v1320 = vpack.c.b16 %v1301, %v1300
      %v1321 = vpack.c.b16 %v1303, %v1302
      %v1322 = vpack.c.b16 %v1305, %v1304
      %v1323 = vpack.c.b16 %v1307, %v1306
      %v1325 = vsel %vm637, %v1308, 0
      %v1328 = vsel %vm637, %v1309, 0
      %v1331 = vsel %vm637, %v1310, 0
      %v1334 = vsel %vm637, %v1311, 0
      %v1337 = vsel %vm637, %v1312, 0
      %v1340 = vsel %vm637, %v1313, 0
      %v1343 = vsel %vm637, %v1314, 0
      %v1346 = vsel %vm637, %v1315, 0
      %v1349 = vsel %vm637, %v1316, 0
      %v1352 = vsel %vm637, %v1317, 0
      %v1355 = vsel %vm637, %v1318, 0
      %v1358 = vsel %vm637, %v1319, 0
      %v1361 = vsel %vm637, %v1320, 0
      %v1364 = vsel %vm637, %v1321, 0
      %v1367 = vsel %vm637, %v1322, 0
      %v1370 = vsel %vm637, %v1323, 0
      %v1373 = vsel %vm686, %v1275, 0
      %1375 = vmatprep.subr.bf16.mxu0 0
      %1376 = vmatpush1.bf16.msra.mxu0 %v1373
      %1377 = vmatprep.subr.bf16.mxu0 0
      %1378 = vmatpush1.bf16.msra.mxu0 0
      %1379 = vmatprep.subr.bf16.mxu0 0
      %1380 = vmatpush1.bf16.msra.mxu0 0
      %1381 = vmatprep.subr.bf16.mxu0 0
      %1382 = vmatpush1.bf16.msra.mxu0 0
      %1383 = vmatprep.subr.bf16.mxu0 0
      %1384 = vmatpush1.bf16.msra.mxu0 0
      %1385 = vmatprep.subr.bf16.mxu0 0
      %1386 = vmatpush1.bf16.msra.mxu0 0
      %1387 = vmatprep.subr.bf16.mxu0 0
      %1388 = vmatpush1.bf16.msra.mxu0 0
      %1389 = vmatprep.subr.bf16.mxu0 0
      %1390 = vmatpush1.bf16.msra.mxu0 0
      %1391 = vmatprep.subr.bf16.mxu0 0
      %1392 = vmatpush1.bf16.msra.mxu0 0
      %1393 = vmatprep.subr.bf16.mxu0 0
      %1394 = vmatpush1.bf16.msra.mxu0 0
      %1395 = vmatprep.subr.bf16.mxu0 0
      %1396 = vmatpush1.bf16.msra.mxu0 0
      %1397 = vmatprep.subr.bf16.mxu0 0
      %1398 = vmatpush1.bf16.msra.mxu0 0
      %1399 = vmatprep.subr.bf16.mxu0 0
      %1400 = vmatpush1.bf16.msra.mxu0 0
      %1401 = vmatprep.subr.bf16.mxu0 0
      %1402 = vmatpush1.bf16.msra.mxu0 0
      %1403 = vmatprep.subr.bf16.mxu0 0
      %1404 = vmatpush1.bf16.msra.mxu0 0
      %1405 = vmatprep.subr.bf16.mxu0 0
      %1406 = vmatpush1.bf16.msra.mxu0 0
      %1407 = vmatprep.mubr.bf16.mxu0 0
      %1408 = vmatmul.mubr.bf16.gmra.mrb[0].mxu0 %v1325
      %v1409 = vpop.f32.mrb[0].mxu0
      %v1410 = vadd.f32 0.0, %v1409
      %v1411 = vpop.f32.mrb[0].mxu0
      %v1412 = vpop.f32.mrb[0].mxu0
      %v1413 = vadd.f32 0.0, %v1412
      %v1414 = vpop.f32.mrb[0].mxu0
      %1415 = vmatprep.mubr.bf16.mxu0 0
      %1416 = vmatmul.mubr.bf16.gmra.mrb[0].mxu0 %v1328
      %v1417 = vpop.f32.mrb[0].mxu0
      %v1418 = vadd.f32 0.0, %v1417
      %v1419 = vpop.f32.mrb[0].mxu0
      %v1420 = vpop.f32.mrb[0].mxu0
      %v1421 = vadd.f32 0.0, %v1420
      %v1422 = vpop.f32.mrb[0].mxu0
      %1423 = vmatprep.mubr.bf16.mxu0 0
      %1424 = vmatmul.mubr.bf16.gmra.mrb[0].mxu0 %v1331
      %v1425 = vpop.f32.mrb[0].mxu0
      %v1426 = vadd.f32 0.0, %v1425
      %v1427 = vpop.f32.mrb[0].mxu0
      %v1428 = vpop.f32.mrb[0].mxu0
      %v1429 = vadd.f32 0.0, %v1428
      %v1430 = vpop.f32.mrb[0].mxu0
      %1431 = vmatprep.mubr.bf16.mxu0 0
      %1432 = vmatmul.mubr.bf16.gmra.mrb[0].mxu0 %v1334
      %v1433 = vpop.f32.mrb[0].mxu0
      %v1434 = vadd.f32 0.0, %v1433
      %v1435 = vpop.f32.mrb[0].mxu0
      %v1436 = vpop.f32.mrb[0].mxu0
      %v1437 = vadd.f32 0.0, %v1436
      %v1438 = vpop.f32.mrb[0].mxu0
      %1439 = vmatprep.mubr.bf16.mxu0 0
      %1440 = vmatmul.mubr.bf16.gmra.mrb[0].mxu0 %v1337
      %v1441 = vpop.f32.mrb[0].mxu0
      %v1442 = vadd.f32 0.0, %v1441
      %v1443 = vpop.f32.mrb[0].mxu0
      %v1444 = vpop.f32.mrb[0].mxu0
      %v1445 = vadd.f32 0.0, %v1444
      %v1446 = vpop.f32.mrb[0].mxu0
      %1447 = vmatprep.mubr.bf16.mxu0 0
      %1448 = vmatmul.mubr.bf16.gmra.mrb[0].mxu0 %v1340
      %v1449 = vpop.f32.mrb[0].mxu0
      %v1450 = vadd.f32 0.0, %v1449
      %v1451 = vpop.f32.mrb[0].mxu0
      %v1452 = vpop.f32.mrb[0].mxu0
      %v1453 = vadd.f32 0.0, %v1452
      %v1454 = vpop.f32.mrb[0].mxu0
      %1455 = vmatprep.mubr.bf16.mxu0 0
      %1456 = vmatmul.mubr.bf16.gmra.mrb[0].mxu0 %v1343
      %v1457 = vpop.f32.mrb[0].mxu0
      %v1458 = vadd.f32 0.0, %v1457
      %v1459 = vpop.f32.mrb[0].mxu0
      %v1460 = vpop.f32.mrb[0].mxu0
      %v1461 = vadd.f32 0.0, %v1460
      %v1462 = vpop.f32.mrb[0].mxu0
      %1463 = vmatprep.mubr.bf16.mxu0 0
      %1464 = vmatmul.mubr.bf16.gmra.mrb[0].mxu0 %v1346
      %v1465 = vpop.f32.mrb[0].mxu0
      %v1466 = vadd.f32 0.0, %v1465
      %v1467 = vpop.f32.mrb[0].mxu0
      %v1468 = vpop.f32.mrb[0].mxu0
      %v1469 = vadd.f32 0.0, %v1468
      %v1470 = vpop.f32.mrb[0].mxu0
      %1471 = vmatprep.mubr.bf16.mxu0 0
      %1472 = vmatmul.mubr.bf16.gmra.mrb[0].mxu0 %v1349
      %v1473 = vpop.f32.mrb[0].mxu0
      %v1474 = vadd.f32 0.0, %v1473
      %v1475 = vpop.f32.mrb[0].mxu0
      %v1476 = vpop.f32.mrb[0].mxu0
      %v1477 = vadd.f32 0.0, %v1476
      %v1478 = vpop.f32.mrb[0].mxu0
      %1479 = vmatprep.mubr.bf16.mxu0 0
      %1480 = vmatmul.mubr.bf16.gmra.mrb[0].mxu0 %v1352
      %v1481 = vpop.f32.mrb[0].mxu0
      %v1482 = vadd.f32 0.0, %v1481
      %v1483 = vpop.f32.mrb[0].mxu0
      %v1484 = vpop.f32.mrb[0].mxu0
      %v1485 = vadd.f32 0.0, %v1484
      %v1486 = vpop.f32.mrb[0].mxu0
      %1487 = vmatprep.mubr.bf16.mxu0 0
      %1488 = vmatmul.mubr.bf16.gmra.mrb[0].mxu0 %v1355
      %v1489 = vpop.f32.mrb[0].mxu0
      %v1490 = vadd.f32 0.0, %v1489
      %v1491 = vpop.f32.mrb[0].mxu0
      %v1492 = vpop.f32.mrb[0].mxu0
      %v1493 = vadd.f32 0.0, %v1492
      %v1494 = vpop.f32.mrb[0].mxu0
      %1495 = vmatprep.mubr.bf16.mxu0 0
      %1496 = vmatmul.mubr.bf16.gmra.mrb[0].mxu0 %v1358
      %v1497 = vpop.f32.mrb[0].mxu0
      %v1498 = vadd.f32 0.0, %v1497
      %v1499 = vpop.f32.mrb[0].mxu0
      %v1500 = vpop.f32.mrb[0].mxu0
      %v1501 = vadd.f32 0.0, %v1500
      %v1502 = vpop.f32.mrb[0].mxu0
      %1503 = vmatprep.mubr.bf16.mxu0 0
      %1504 = vmatmul.mubr.bf16.gmra.mrb[0].mxu0 %v1361
      %v1505 = vpop.f32.mrb[0].mxu0
      %v1506 = vadd.f32 0.0, %v1505
      %v1507 = vpop.f32.mrb[0].mxu0
      %v1508 = vpop.f32.mrb[0].mxu0
      %v1509 = vadd.f32 0.0, %v1508
      %v1510 = vpop.f32.mrb[0].mxu0
      %1511 = vmatprep.mubr.bf16.mxu0 0
      %1512 = vmatmul.mubr.bf16.gmra.mrb[0].mxu0 %v1364
      %v1513 = vpop.f32.mrb[0].mxu0
      %v1514 = vadd.f32 0.0, %v1513
      %v1515 = vpop.f32.mrb[0].mxu0
      %v1516 = vpop.f32.mrb[0].mxu0
      %v1517 = vadd.f32 0.0, %v1516
      %v1518 = vpop.f32.mrb[0].mxu0
      %1519 = vmatprep.mubr.bf16.mxu0 0
      %1520 = vmatmul.mubr.bf16.gmra.mrb[0].mxu0 %v1367
      %v1521 = vpop.f32.mrb[0].mxu0
      %v1522 = vadd.f32 0.0, %v1521
      %v1523 = vpop.f32.mrb[0].mxu0
      %v1524 = vpop.f32.mrb[0].mxu0
      %v1525 = vadd.f32 0.0, %v1524
      %v1526 = vpop.f32.mrb[0].mxu0
      %1527 = vmatprep.mubr.bf16.mxu0 0
      %1528 = vmatmul.mubr.bf16.gmra.mrb[0].mxu0 %v1370
      %v1529 = vpop.f32.mrb[0].mxu0
      %v1530 = vadd.f32 0.0, %v1529
      %v1531 = vpop.f32.mrb[0].mxu0
      %v1532 = vpop.f32.mrb[0].mxu0
      %v1533 = vadd.f32 0.0, %v1532
      %v1534 = vpop.f32.mrb[0].mxu0
      %1535 = vdwg.mxu0
      %v1536 = vadd.f32 %v1017, %v1410
      %v1537 = vadd.f32 %v1020, %v1413
      %v1538 = vadd.f32 %v1025, %v1418
      %v1539 = vadd.f32 %v1028, %v1421
      %v1540 = vadd.f32 %v1033, %v1426
      %v1541 = vadd.f32 %v1036, %v1429
      %v1542 = vadd.f32 %v1041, %v1434
      %v1543 = vadd.f32 %v1044, %v1437
      %v1544 = vadd.f32 %v1049, %v1442
      %v1545 = vadd.f32 %v1052, %v1445
      %v1546 = vadd.f32 %v1057, %v1450
      %v1547 = vadd.f32 %v1060, %v1453
      %v1548 = vadd.f32 %v1065, %v1458
      %v1549 = vadd.f32 %v1068, %v1461
      %v1550 = vadd.f32 %v1073, %v1466
      %v1551 = vadd.f32 %v1076, %v1469
      %v1552 = vadd.f32 %v1081, %v1474
      %v1553 = vadd.f32 %v1084, %v1477
      %v1554 = vadd.f32 %v1089, %v1482
      %v1555 = vadd.f32 %v1092, %v1485
      %v1556 = vadd.f32 %v1097, %v1490
      %v1557 = vadd.f32 %v1100, %v1493
      %v1558 = vadd.f32 %v1105, %v1498
      %v1559 = vadd.f32 %v1108, %v1501
      %v1560 = vadd.f32 %v1113, %v1506
      %v1561 = vadd.f32 %v1116, %v1509
      %v1562 = vadd.f32 %v1121, %v1514
      %v1563 = vadd.f32 %v1124, %v1517
      %v1564 = vadd.f32 %v1129, %v1522
      %v1565 = vadd.f32 %v1132, %v1525
      %v1566 = vadd.f32 %v1137, %v1530
      %v1567 = vadd.f32 %v1140, %v1533
      %s1568 = scalar_lea.vmem %s1, 6
      %v1569 = vld [vmem:[%s1568] sm:$0x3]
      %v1572 = vunpack.c.l.b16 %v193
      %v1573 = vunpack.c.l.b16 %v194
      %v1574 = vpack.c.b16 %v1573, %v1572
      %v1576 = vsel %vm637, %v1574, 0
      %v1579 = vsel %vm686, %v1569, 0
      %1581 = vmatprep.subr.bf16.mxu0 0
      %1582 = vmatpush1.bf16.msra.mxu0 %v1579
      %1583 = vmatprep.subr.bf16.mxu0 0
      %1584 = vmatpush1.bf16.msra.mxu0 0
      %1585 = vmatprep.subr.bf16.mxu0 0
      %1586 = vmatpush1.bf16.msra.mxu0 0
      %1587 = vmatprep.subr.bf16.mxu0 0
      %1588 = vmatpush1.bf16.msra.mxu0 0
      %1589 = vmatprep.subr.bf16.mxu0 0
      %1590 = vmatpush1.bf16.msra.mxu0 0
      %1591 = vmatprep.subr.bf16.mxu0 0
      %1592 = vmatpush1.bf16.msra.mxu0 0
      %1593 = vmatprep.subr.bf16.mxu0 0
      %1594 = vmatpush1.bf16.msra.mxu0 0
      %1595 = vmatprep.subr.bf16.mxu0 0
      %1596 = vmatpush1.bf16.msra.mxu0 0
      %1597 = vmatprep.subr.bf16.mxu0 0
      %1598 = vmatpush1.bf16.msra.mxu0 0
      %1599 = vmatprep.subr.bf16.mxu0 0
      %1600 = vmatpush1.bf16.msra.mxu0 0
      %1601 = vmatprep.subr.bf16.mxu0 0
      %1602 = vmatpush1.bf16.msra.mxu0 0
      %1603 = vmatprep.subr.bf16.mxu0 0
      %1604 = vmatpush1.bf16.msra.mxu0 0
      %1605 = vmatprep.subr.bf16.mxu0 0
      %1606 = vmatpush1.bf16.msra.mxu0 0
      %1607 = vmatprep.subr.bf16.mxu0 0
      %1608 = vmatpush1.bf16.msra.mxu0 0
      %1609 = vmatprep.subr.bf16.mxu0 0
      %1610 = vmatpush1.bf16.msra.mxu0 0
      %1611 = vmatprep.subr.bf16.mxu0 0
      %1612 = vmatpush1.bf16.msra.mxu0 0
      %1613 = vmatprep.mubr.bf16.mxu0 0
      %1614 = vmatmul.mubr.bf16.gmra.mrb[0].mxu0 %v935
      %v1615 = vpop.f32.mrb[0].mxu0
      %v1616 = vadd.f32 0.0, %v1615
      %v1617 = vpop.f32.mrb[0].mxu0
      %v1618 = vpop.f32.mrb[0].mxu0
      %v1619 = vadd.f32 0.0, %v1618
      %v1620 = vpop.f32.mrb[0].mxu0
      %1621 = vmatprep.mubr.bf16.mxu0 0
      %1622 = vmatmul.mubr.bf16.gmra.mrb[0].mxu0 %v938
      %v1623 = vpop.f32.mrb[0].mxu0
      %v1624 = vadd.f32 0.0, %v1623
      %v1625 = vpop.f32.mrb[0].mxu0
      %v1626 = vpop.f32.mrb[0].mxu0
      %v1627 = vadd.f32 0.0, %v1626
      %v1628 = vpop.f32.mrb[0].mxu0
      %1629 = vmatprep.mubr.bf16.mxu0 0
      %1630 = vmatmul.mubr.bf16.gmra.mrb[0].mxu0 %v941
      %v1631 = vpop.f32.mrb[0].mxu0
      %v1632 = vadd.f32 0.0, %v1631
      %v1633 = vpop.f32.mrb[0].mxu0
      %v1634 = vpop.f32.mrb[0].mxu0
      %v1635 = vadd.f32 0.0, %v1634
      %v1636 = vpop.f32.mrb[0].mxu0
      %1637 = vmatprep.mubr.bf16.mxu0 0
      %1638 = vmatmul.mubr.bf16.gmra.mrb[0].mxu0 %v944
      %v1639 = vpop.f32.mrb[0].mxu0
      %v1640 = vadd.f32 0.0, %v1639
      %v1641 = vpop.f32.mrb[0].mxu0
      %v1642 = vpop.f32.mrb[0].mxu0
      %v1643 = vadd.f32 0.0, %v1642
      %v1644 = vpop.f32.mrb[0].mxu0
      %1645 = vmatprep.mubr.bf16.mxu0 0
      %1646 = vmatmul.mubr.bf16.gmra.mrb[0].mxu0 %v947
      %v1647 = vpop.f32.mrb[0].mxu0
      %v1648 = vadd.f32 0.0, %v1647
      %v1649 = vpop.f32.mrb[0].mxu0
      %v1650 = vpop.f32.mrb[0].mxu0
      %v1651 = vadd.f32 0.0, %v1650
      %v1652 = vpop.f32.mrb[0].mxu0
      %1653 = vmatprep.mubr.bf16.mxu0 0
      %1654 = vmatmul.mubr.bf16.gmra.mrb[0].mxu0 %v950
      %v1655 = vpop.f32.mrb[0].mxu0
      %v1656 = vadd.f32 0.0, %v1655
      %v1657 = vpop.f32.mrb[0].mxu0
      %v1658 = vpop.f32.mrb[0].mxu0
      %v1659 = vadd.f32 0.0, %v1658
      %v1660 = vpop.f32.mrb[0].mxu0
      %1661 = vmatprep.mubr.bf16.mxu0 0
      %1662 = vmatmul.mubr.bf16.gmra.mrb[0].mxu0 %v953
      %v1663 = vpop.f32.mrb[0].mxu0
      %v1664 = vadd.f32 0.0, %v1663
      %v1665 = vpop.f32.mrb[0].mxu0
      %v1666 = vpop.f32.mrb[0].mxu0
      %v1667 = vadd.f32 0.0, %v1666
      %v1668 = vpop.f32.mrb[0].mxu0
      %1669 = vmatprep.mubr.bf16.mxu0 0
      %1670 = vmatmul.mubr.bf16.gmra.mrb[0].mxu0 %v956
      %v1671 = vpop.f32.mrb[0].mxu0
      %v1672 = vadd.f32 0.0, %v1671
      %v1673 = vpop.f32.mrb[0].mxu0
      %v1674 = vpop.f32.mrb[0].mxu0
      %v1675 = vadd.f32 0.0, %v1674
      %v1676 = vpop.f32.mrb[0].mxu0
      %1677 = vmatprep.mubr.bf16.mxu0 0
      %1678 = vmatmul.mubr.bf16.gmra.mrb[0].mxu0 %v959
      %v1679 = vpop.f32.mrb[0].mxu0
      %v1680 = vadd.f32 0.0, %v1679
      %v1681 = vpop.f32.mrb[0].mxu0
      %v1682 = vpop.f32.mrb[0].mxu0
      %v1683 = vadd.f32 0.0, %v1682
      %v1684 = vpop.f32.mrb[0].mxu0
      %1685 = vmatprep.mubr.bf16.mxu0 0
      %1686 = vmatmul.mubr.bf16.gmra.mrb[0].mxu0 %v962
      %v1687 = vpop.f32.mrb[0].mxu0
      %v1688 = vadd.f32 0.0, %v1687
      %v1689 = vpop.f32.mrb[0].mxu0
      %v1690 = vpop.f32.mrb[0].mxu0
      %v1691 = vadd.f32 0.0, %v1690
      %v1692 = vpop.f32.mrb[0].mxu0
      %1693 = vmatprep.mubr.bf16.mxu0 0
      %1694 = vmatmul.mubr.bf16.gmra.mrb[0].mxu0 %v965
      %v1695 = vpop.f32.mrb[0].mxu0
      %v1696 = vadd.f32 0.0, %v1695
      %v1697 = vpop.f32.mrb[0].mxu0
      %v1698 = vpop.f32.mrb[0].mxu0
      %v1699 = vadd.f32 0.0, %v1698
      %v1700 = vpop.f32.mrb[0].mxu0
      %1701 = vmatprep.mubr.bf16.mxu0 0
      %1702 = vmatmul.mubr.bf16.gmra.mrb[0].mxu0 %v968
      %v1703 = vpop.f32.mrb[0].mxu0
      %v1704 = vadd.f32 0.0, %v1703
      %v1705 = vpop.f32.mrb[0].mxu0
      %v1706 = vpop.f32.mrb[0].mxu0
      %v1707 = vadd.f32 0.0, %v1706
      %v1708 = vpop.f32.mrb[0].mxu0
      %1709 = vmatprep.mubr.bf16.mxu0 0
      %1710 = vmatmul.mubr.bf16.gmra.mrb[0].mxu0 %v971
      %v1711 = vpop.f32.mrb[0].mxu0
      %v1712 = vadd.f32 0.0, %v1711
      %v1713 = vpop.f32.mrb[0].mxu0
      %v1714 = vpop.f32.mrb[0].mxu0
      %v1715 = vadd.f32 0.0, %v1714
      %v1716 = vpop.f32.mrb[0].mxu0
      %1717 = vmatprep.mubr.bf16.mxu0 0
      %1718 = vmatmul.mubr.bf16.gmra.mrb[0].mxu0 %v974
      %v1719 = vpop.f32.mrb[0].mxu0
      %v1720 = vadd.f32 0.0, %v1719
      %v1721 = vpop.f32.mrb[0].mxu0
      %v1722 = vpop.f32.mrb[0].mxu0
      %v1723 = vadd.f32 0.0, %v1722
      %v1724 = vpop.f32.mrb[0].mxu0
      %1725 = vmatprep.mubr.bf16.mxu0 0
      %1726 = vmatmul.mubr.bf16.gmra.mrb[0].mxu0 %v977
      %v1727 = vpop.f32.mrb[0].mxu0
      %v1728 = vadd.f32 0.0, %v1727
      %v1729 = vpop.f32.mrb[0].mxu0
      %v1730 = vpop.f32.mrb[0].mxu0
      %v1731 = vadd.f32 0.0, %v1730
      %v1732 = vpop.f32.mrb[0].mxu0
      %1733 = vmatprep.mubr.bf16.mxu0 0
      %1734 = vmatmul.mubr.bf16.gmra.mrb[0].mxu0 %v1576
      %v1735 = vpop.f32.mrb[0].mxu0
      %v1736 = vadd.f32 0.0, %v1735
      %v1737 = vpop.f32.mrb[0].mxu0
      %v1738 = vpop.f32.mrb[0].mxu0
      %v1739 = vadd.f32 0.0, %v1738
      %v1740 = vpop.f32.mrb[0].mxu0
      %1741 = vdwg.mxu0
      %v1742 = vadd.f32 %v1536, %v1616
      %v1743 = vadd.f32 %v1537, %v1619
      %v1744 = vadd.f32 %v1538, %v1624
      %v1745 = vadd.f32 %v1539, %v1627
      %v1746 = vadd.f32 %v1540, %v1632
      %v1747 = vadd.f32 %v1541, %v1635
      %v1748 = vadd.f32 %v1542, %v1640
      %v1749 = vadd.f32 %v1543, %v1643
      %v1750 = vadd.f32 %v1544, %v1648
      %v1751 = vadd.f32 %v1545, %v1651
      %v1752 = vadd.f32 %v1546, %v1656
      %v1753 = vadd.f32 %v1547, %v1659
      %v1754 = vadd.f32 %v1548, %v1664
      %v1755 = vadd.f32 %v1549, %v1667
      %v1756 = vadd.f32 %v1550, %v1672
      %v1757 = vadd.f32 %v1551, %v1675
      %v1758 = vadd.f32 %v1552, %v1680
      %v1759 = vadd.f32 %v1553, %v1683
      %v1760 = vadd.f32 %v1554, %v1688
      %v1761 = vadd.f32 %v1555, %v1691
      %v1762 = vadd.f32 %v1556, %v1696
      %v1763 = vadd.f32 %v1557, %v1699
      %v1764 = vadd.f32 %v1558, %v1704
      %v1765 = vadd.f32 %v1559, %v1707
      %v1766 = vadd.f32 %v1560, %v1712
      %v1767 = vadd.f32 %v1561, %v1715
      %v1768 = vadd.f32 %v1562, %v1720
      %v1769 = vadd.f32 %v1563, %v1723
      %v1770 = vadd.f32 %v1564, %v1728
      %v1771 = vadd.f32 %v1565, %v1731
      %v1772 = vadd.f32 %v1566, %v1736
      %v1773 = vadd.f32 %v1567, %v1739
      %v1775 = vshrl.u32 %v193, 16
      %v1777 = vrot.slane %v1775, 4
      %v1778 = vshll.u32 %v193, 16
      %v1780 = vrot.slane %v1778, 5
      %v1781 = vor.u32 %v1777, %v1780
      %v1782 = vrot.slane %v1781, 4
      %v1784 = vshll.u32 %v194, 16
      %v1786 = vrot.slane %v1784, 5
      %v1787 = vsel %vm202, %v1782, %v1786
      %v1788 = vshrl.u32 %v194, 16
      %v1790 = vrot.slane %v1788, 4
      %v1791 = vor.u32 %v1790, %v1786
      %v1792 = vrot.slane %v1791, 4
      %v1794 = vshll.u32 %v195, 16
      %v1796 = vrot.slane %v1794, 5
      %v1797 = vsel %vm202, %v1792, %v1796
      %s1798 = scalar_lea.vmem %s1, 8
      %v1799 = vld [vmem:[%s1798] sm:$0x3]
      %v1800 = vunpack.c.l.b16 %v1787
      %v1801 = vunpack.c.l.b16 %v1797
      %v1802 = vpack.c.b16 %v1801, %v1800
      %v1804 = vsel %vm637, %v1802, 0
      %v1807 = vsel %vm686, %v1799, 0
      %1809 = vmatprep.subr.bf16.mxu0 0
      %1810 = vmatpush1.bf16.msra.mxu0 %v1807
      %1811 = vmatprep.subr.bf16.mxu0 0
      %1812 = vmatpush1.bf16.msra.mxu0 0
      %1813 = vmatprep.subr.bf16.mxu0 0
      %1814 = vmatpush1.bf16.msra.mxu0 0
      %1815 = vmatprep.subr.bf16.mxu0 0
      %1816 = vmatpush1.bf16.msra.mxu0 0
      %1817 = vmatprep.subr.bf16.mxu0 0
      %1818 = vmatpush1.bf16.msra.mxu0 0
      %1819 = vmatprep.subr.bf16.mxu0 0
      %1820 = vmatpush1.bf16.msra.mxu0 0
      %1821 = vmatprep.subr.bf16.mxu0 0
      %1822 = vmatpush1.bf16.msra.mxu0 0
      %1823 = vmatprep.subr.bf16.mxu0 0
      %1824 = vmatpush1.bf16.msra.mxu0 0
      %1825 = vmatprep.subr.bf16.mxu0 0
      %1826 = vmatpush1.bf16.msra.mxu0 0
      %1827 = vmatprep.subr.bf16.mxu0 0
      %1828 = vmatpush1.bf16.msra.mxu0 0
      %1829 = vmatprep.subr.bf16.mxu0 0
      %1830 = vmatpush1.bf16.msra.mxu0 0
      %1831 = vmatprep.subr.bf16.mxu0 0
      %1832 = vmatpush1.bf16.msra.mxu0 0
      %1833 = vmatprep.subr.bf16.mxu0 0
      %1834 = vmatpush1.bf16.msra.mxu0 0
      %1835 = vmatprep.subr.bf16.mxu0 0
      %1836 = vmatpush1.bf16.msra.mxu0 0
      %1837 = vmatprep.subr.bf16.mxu0 0
      %1838 = vmatpush1.bf16.msra.mxu0 0
      %1839 = vmatprep.subr.bf16.mxu0 0
      %1840 = vmatpush1.bf16.msra.mxu0 0
      %1841 = vmatprep.mubr.bf16.mxu0 0
      %1842 = vmatmul.mubr.bf16.gmra.mrb[0].mxu0 %v642
      %v1843 = vpop.f32.mrb[0].mxu0
      %v1844 = vadd.f32 0.0, %v1843
      %v1845 = vpop.f32.mrb[0].mxu0
      %v1846 = vpop.f32.mrb[0].mxu0
      %v1847 = vadd.f32 0.0, %v1846
      %v1848 = vpop.f32.mrb[0].mxu0
      %1849 = vmatprep.mubr.bf16.mxu0 0
      %1850 = vmatmul.mubr.bf16.gmra.mrb[0].mxu0 %v645
      %v1851 = vpop.f32.mrb[0].mxu0
      %v1852 = vadd.f32 0.0, %v1851
      %v1853 = vpop.f32.mrb[0].mxu0
      %v1854 = vpop.f32.mrb[0].mxu0
      %v1855 = vadd.f32 0.0, %v1854
      %v1856 = vpop.f32.mrb[0].mxu0
      %1857 = vmatprep.mubr.bf16.mxu0 0
      %1858 = vmatmul.mubr.bf16.gmra.mrb[0].mxu0 %v648
      %v1859 = vpop.f32.mrb[0].mxu0
      %v1860 = vadd.f32 0.0, %v1859
      %v1861 = vpop.f32.mrb[0].mxu0
      %v1862 = vpop.f32.mrb[0].mxu0
      %v1863 = vadd.f32 0.0, %v1862
      %v1864 = vpop.f32.mrb[0].mxu0
      %1865 = vmatprep.mubr.bf16.mxu0 0
      %1866 = vmatmul.mubr.bf16.gmra.mrb[0].mxu0 %v651
      %v1867 = vpop.f32.mrb[0].mxu0
      %v1868 = vadd.f32 0.0, %v1867
      %v1869 = vpop.f32.mrb[0].mxu0
      %v1870 = vpop.f32.mrb[0].mxu0
      %v1871 = vadd.f32 0.0, %v1870
      %v1872 = vpop.f32.mrb[0].mxu0
      %1873 = vmatprep.mubr.bf16.mxu0 0
      %1874 = vmatmul.mubr.bf16.gmra.mrb[0].mxu0 %v654
      %v1875 = vpop.f32.mrb[0].mxu0
      %v1876 = vadd.f32 0.0, %v1875
      %v1877 = vpop.f32.mrb[0].mxu0
      %v1878 = vpop.f32.mrb[0].mxu0
      %v1879 = vadd.f32 0.0, %v1878
      %v1880 = vpop.f32.mrb[0].mxu0
      %1881 = vmatprep.mubr.bf16.mxu0 0
      %1882 = vmatmul.mubr.bf16.gmra.mrb[0].mxu0 %v657
      %v1883 = vpop.f32.mrb[0].mxu0
      %v1884 = vadd.f32 0.0, %v1883
      %v1885 = vpop.f32.mrb[0].mxu0
      %v1886 = vpop.f32.mrb[0].mxu0
      %v1887 = vadd.f32 0.0, %v1886
      %v1888 = vpop.f32.mrb[0].mxu0
      %1889 = vmatprep.mubr.bf16.mxu0 0
      %1890 = vmatmul.mubr.bf16.gmra.mrb[0].mxu0 %v660
      %v1891 = vpop.f32.mrb[0].mxu0
      %v1892 = vadd.f32 0.0, %v1891
      %v1893 = vpop.f32.mrb[0].mxu0
      %v1894 = vpop.f32.mrb[0].mxu0
      %v1895 = vadd.f32 0.0, %v1894
      %v1896 = vpop.f32.mrb[0].mxu0
      %1897 = vmatprep.mubr.bf16.mxu0 0
      %1898 = vmatmul.mubr.bf16.gmra.mrb[0].mxu0 %v663
      %v1899 = vpop.f32.mrb[0].mxu0
      %v1900 = vadd.f32 0.0, %v1899
      %v1901 = vpop.f32.mrb[0].mxu0
      %v1902 = vpop.f32.mrb[0].mxu0
      %v1903 = vadd.f32 0.0, %v1902
      %v1904 = vpop.f32.mrb[0].mxu0
      %1905 = vmatprep.mubr.bf16.mxu0 0
      %1906 = vmatmul.mubr.bf16.gmra.mrb[0].mxu0 %v666
      %v1907 = vpop.f32.mrb[0].mxu0
      %v1908 = vadd.f32 0.0, %v1907
      %v1909 = vpop.f32.mrb[0].mxu0
      %v1910 = vpop.f32.mrb[0].mxu0
      %v1911 = vadd.f32 0.0, %v1910
      %v1912 = vpop.f32.mrb[0].mxu0
      %1913 = vmatprep.mubr.bf16.mxu0 0
      %1914 = vmatmul.mubr.bf16.gmra.mrb[0].mxu0 %v669
      %v1915 = vpop.f32.mrb[0].mxu0
      %v1916 = vadd.f32 0.0, %v1915
      %v1917 = vpop.f32.mrb[0].mxu0
      %v1918 = vpop.f32.mrb[0].mxu0
      %v1919 = vadd.f32 0.0, %v1918
      %v1920 = vpop.f32.mrb[0].mxu0
      %1921 = vmatprep.mubr.bf16.mxu0 0
      %1922 = vmatmul.mubr.bf16.gmra.mrb[0].mxu0 %v672
      %v1923 = vpop.f32.mrb[0].mxu0
      %v1924 = vadd.f32 0.0, %v1923
      %v1925 = vpop.f32.mrb[0].mxu0
      %v1926 = vpop.f32.mrb[0].mxu0
      %v1927 = vadd.f32 0.0, %v1926
      %v1928 = vpop.f32.mrb[0].mxu0
      %1929 = vmatprep.mubr.bf16.mxu0 0
      %1930 = vmatmul.mubr.bf16.gmra.mrb[0].mxu0 %v675
      %v1931 = vpop.f32.mrb[0].mxu0
      %v1932 = vadd.f32 0.0, %v1931
      %v1933 = vpop.f32.mrb[0].mxu0
      %v1934 = vpop.f32.mrb[0].mxu0
      %v1935 = vadd.f32 0.0, %v1934
      %v1936 = vpop.f32.mrb[0].mxu0
      %1937 = vmatprep.mubr.bf16.mxu0 0
      %1938 = vmatmul.mubr.bf16.gmra.mrb[0].mxu0 %v678
      %v1939 = vpop.f32.mrb[0].mxu0
      %v1940 = vadd.f32 0.0, %v1939
      %v1941 = vpop.f32.mrb[0].mxu0
      %v1942 = vpop.f32.mrb[0].mxu0
      %v1943 = vadd.f32 0.0, %v1942
      %v1944 = vpop.f32.mrb[0].mxu0
      %1945 = vmatprep.mubr.bf16.mxu0 0
      %1946 = vmatmul.mubr.bf16.gmra.mrb[0].mxu0 %v681
      %v1947 = vpop.f32.mrb[0].mxu0
      %v1948 = vadd.f32 0.0, %v1947
      %v1949 = vpop.f32.mrb[0].mxu0
      %v1950 = vpop.f32.mrb[0].mxu0
      %v1951 = vadd.f32 0.0, %v1950
      %v1952 = vpop.f32.mrb[0].mxu0
      %1953 = vmatprep.mubr.bf16.mxu0 0
      %1954 = vmatmul.mubr.bf16.gmra.mrb[0].mxu0 %v684
      %v1955 = vpop.f32.mrb[0].mxu0
      %v1956 = vadd.f32 0.0, %v1955
      %v1957 = vpop.f32.mrb[0].mxu0
      %v1958 = vpop.f32.mrb[0].mxu0
      %v1959 = vadd.f32 0.0, %v1958
      %v1960 = vpop.f32.mrb[0].mxu0
      %1961 = vmatprep.mubr.bf16.mxu0 0
      %1962 = vmatmul.mubr.bf16.gmra.mrb[0].mxu0 %v1804
      %v1963 = vpop.f32.mrb[0].mxu0
      %v1964 = vadd.f32 0.0, %v1963
      %v1965 = vpop.f32.mrb[0].mxu0
      %v1966 = vpop.f32.mrb[0].mxu0
      %v1967 = vadd.f32 0.0, %v1966
      %v1968 = vpop.f32.mrb[0].mxu0
      %1969 = vdwg.mxu0
      %v1970 = vadd.f32 %v1742, %v1844
      %v1971 = vadd.f32 %v1743, %v1847
      %v1972 = vadd.f32 %v1744, %v1852
      %v1973 = vadd.f32 %v1745, %v1855
      %v1974 = vadd.f32 %v1746, %v1860
      %v1975 = vadd.f32 %v1747, %v1863
      %v1976 = vadd.f32 %v1748, %v1868
      %v1977 = vadd.f32 %v1749, %v1871
      %v1978 = vadd.f32 %v1750, %v1876
      %v1979 = vadd.f32 %v1751, %v1879
      %v1980 = vadd.f32 %v1752, %v1884
      %v1981 = vadd.f32 %v1753, %v1887
      %v1982 = vadd.f32 %v1754, %v1892
      %v1983 = vadd.f32 %v1755, %v1895
      %v1984 = vadd.f32 %v1756, %v1900
      %v1985 = vadd.f32 %v1757, %v1903
      %v1986 = vadd.f32 %v1758, %v1908
      %v1987 = vadd.f32 %v1759, %v1911
      %v1988 = vadd.f32 %v1760, %v1916
      %v1989 = vadd.f32 %v1761, %v1919
      %v1990 = vadd.f32 %v1762, %v1924
      %v1991 = vadd.f32 %v1763, %v1927
      %v1992 = vadd.f32 %v1764, %v1932
      %v1993 = vadd.f32 %v1765, %v1935
      %v1994 = vadd.f32 %v1766, %v1940
      %v1995 = vadd.f32 %v1767, %v1943
      %v1996 = vadd.f32 %v1768, %v1948
      %v1997 = vadd.f32 %v1769, %v1951
      %v1998 = vadd.f32 %v1770, %v1956
      %v1999 = vadd.f32 %v1771, %v1959
      %v2000 = vadd.f32 %v1772, %v1964
      %v2001 = vadd.f32 %v1773, %v1967
      %v2003 = vrot.slane %v193, 5
      %v2004 = vrot.slane %v2003, 4
      %v2005 = vrot.slane %v194, 5
      %v2006 = vsel %vm1161, %v2004, %v2005
      %v2007 = vrot.slane %v2005, 4
      %v2008 = vrot.slane %v195, 5
      %v2009 = vsel %vm1161, %v2007, %v2008
      %s2010 = scalar_lea.vmem %s1, 10
      %v2011 = vld [vmem:[%s2010] sm:$0x3]
      %v2012 = vunpack.c.l.b16 %v2006
      %v2013 = vunpack.c.l.b16 %v2009
      %v2014 = vpack.c.b16 %v2013, %v2012
      %v2016 = vsel %vm637, %v2014, 0
      %v2019 = vsel %vm686, %v2011, 0
      %2021 = vmatprep.subr.bf16.mxu0 0
      %2022 = vmatpush1.bf16.msra.mxu0 %v2019
      %2023 = vmatprep.subr.bf16.mxu0 0
      %2024 = vmatpush1.bf16.msra.mxu0 0
      %2025 = vmatprep.subr.bf16.mxu0 0
      %2026 = vmatpush1.bf16.msra.mxu0 0
      %2027 = vmatprep.subr.bf16.mxu0 0
      %2028 = vmatpush1.bf16.msra.mxu0 0
      %2029 = vmatprep.subr.bf16.mxu0 0
      %2030 = vmatpush1.bf16.msra.mxu0 0
      %2031 = vmatprep.subr.bf16.mxu0 0
      %2032 = vmatpush1.bf16.msra.mxu0 0
      %2033 = vmatprep.subr.bf16.mxu0 0
      %2034 = vmatpush1.bf16.msra.mxu0 0
      %2035 = vmatprep.subr.bf16.mxu0 0
      %2036 = vmatpush1.bf16.msra.mxu0 0
      %2037 = vmatprep.subr.bf16.mxu0 0
      %2038 = vmatpush1.bf16.msra.mxu0 0
      %2039 = vmatprep.subr.bf16.mxu0 0
      %2040 = vmatpush1.bf16.msra.mxu0 0
      %2041 = vmatprep.subr.bf16.mxu0 0
      %2042 = vmatpush1.bf16.msra.mxu0 0
      %2043 = vmatprep.subr.bf16.mxu0 0
      %2044 = vmatpush1.bf16.msra.mxu0 0
      %2045 = vmatprep.subr.bf16.mxu0 0
      %2046 = vmatpush1.bf16.msra.mxu0 0
      %2047 = vmatprep.subr.bf16.mxu0 0
      %2048 = vmatpush1.bf16.msra.mxu0 0
      %2049 = vmatprep.subr.bf16.mxu0 0
      %2050 = vmatpush1.bf16.msra.mxu0 0
      %2051 = vmatprep.subr.bf16.mxu0 0
      %2052 = vmatpush1.bf16.msra.mxu0 0
      %2053 = vmatprep.mubr.bf16.mxu0 0
      %2054 = vmatmul.mubr.bf16.gmra.mrb[0].mxu0 %v1328
      %v2055 = vpop.f32.mrb[0].mxu0
      %v2056 = vadd.f32 0.0, %v2055
      %v2057 = vpop.f32.mrb[0].mxu0
      %v2058 = vpop.f32.mrb[0].mxu0
      %v2059 = vadd.f32 0.0, %v2058
      %v2060 = vpop.f32.mrb[0].mxu0
      %2061 = vmatprep.mubr.bf16.mxu0 0
      %2062 = vmatmul.mubr.bf16.gmra.mrb[0].mxu0 %v1331
      %v2063 = vpop.f32.mrb[0].mxu0
      %v2064 = vadd.f32 0.0, %v2063
      %v2065 = vpop.f32.mrb[0].mxu0
      %v2066 = vpop.f32.mrb[0].mxu0
      %v2067 = vadd.f32 0.0, %v2066
      %v2068 = vpop.f32.mrb[0].mxu0
      %2069 = vmatprep.mubr.bf16.mxu0 0
      %2070 = vmatmul.mubr.bf16.gmra.mrb[0].mxu0 %v1334
      %v2071 = vpop.f32.mrb[0].mxu0
      %v2072 = vadd.f32 0.0, %v2071
      %v2073 = vpop.f32.mrb[0].mxu0
      %v2074 = vpop.f32.mrb[0].mxu0
      %v2075 = vadd.f32 0.0, %v2074
      %v2076 = vpop.f32.mrb[0].mxu0
      %2077 = vmatprep.mubr.bf16.mxu0 0
      %2078 = vmatmul.mubr.bf16.gmra.mrb[0].mxu0 %v1337
      %v2079 = vpop.f32.mrb[0].mxu0
      %v2080 = vadd.f32 0.0, %v2079
      %v2081 = vpop.f32.mrb[0].mxu0
      %v2082 = vpop.f32.mrb[0].mxu0
      %v2083 = vadd.f32 0.0, %v2082
      %v2084 = vpop.f32.mrb[0].mxu0
      %2085 = vmatprep.mubr.bf16.mxu0 0
      %2086 = vmatmul.mubr.bf16.gmra.mrb[0].mxu0 %v1340
      %v2087 = vpop.f32.mrb[0].mxu0
      %v2088 = vadd.f32 0.0, %v2087
      %v2089 = vpop.f32.mrb[0].mxu0
      %v2090 = vpop.f32.mrb[0].mxu0
      %v2091 = vadd.f32 0.0, %v2090
      %v2092 = vpop.f32.mrb[0].mxu0
      %2093 = vmatprep.mubr.bf16.mxu0 0
      %2094 = vmatmul.mubr.bf16.gmra.mrb[0].mxu0 %v1343
      %v2095 = vpop.f32.mrb[0].mxu0
      %v2096 = vadd.f32 0.0, %v2095
      %v2097 = vpop.f32.mrb[0].mxu0
      %v2098 = vpop.f32.mrb[0].mxu0
      %v2099 = vadd.f32 0.0, %v2098
      %v2100 = vpop.f32.mrb[0].mxu0
      %2101 = vmatprep.mubr.bf16.mxu0 0
      %2102 = vmatmul.mubr.bf16.gmra.mrb[0].mxu0 %v1346
      %v2103 = vpop.f32.mrb[0].mxu0
      %v2104 = vadd.f32 0.0, %v2103
      %v2105 = vpop.f32.mrb[0].mxu0
      %v2106 = vpop.f32.mrb[0].mxu0
      %v2107 = vadd.f32 0.0, %v2106
      %v2108 = vpop.f32.mrb[0].mxu0
      %2109 = vmatprep.mubr.bf16.mxu0 0
      %2110 = vmatmul.mubr.bf16.gmra.mrb[0].mxu0 %v1349
      %v2111 = vpop.f32.mrb[0].mxu0
      %v2112 = vadd.f32 0.0, %v2111
      %v2113 = vpop.f32.mrb[0].mxu0
      %v2114 = vpop.f32.mrb[0].mxu0
      %v2115 = vadd.f32 0.0, %v2114
      %v2116 = vpop.f32.mrb[0].mxu0
      %2117 = vmatprep.mubr.bf16.mxu0 0
      %2118 = vmatmul.mubr.bf16.gmra.mrb[0].mxu0 %v1352
      %v2119 = vpop.f32.mrb[0].mxu0
      %v2120 = vadd.f32 0.0, %v2119
      %v2121 = vpop.f32.mrb[0].mxu0
      %v2122 = vpop.f32.mrb[0].mxu0
      %v2123 = vadd.f32 0.0, %v2122
      %v2124 = vpop.f32.mrb[0].mxu0
      %2125 = vmatprep.mubr.bf16.mxu0 0
      %2126 = vmatmul.mubr.bf16.gmra.mrb[0].mxu0 %v1355
      %v2127 = vpop.f32.mrb[0].mxu0
      %v2128 = vadd.f32 0.0, %v2127
      %v2129 = vpop.f32.mrb[0].mxu0
      %v2130 = vpop.f32.mrb[0].mxu0
      %v2131 = vadd.f32 0.0, %v2130
      %v2132 = vpop.f32.mrb[0].mxu0
      %2133 = vmatprep.mubr.bf16.mxu0 0
      %2134 = vmatmul.mubr.bf16.gmra.mrb[0].mxu0 %v1358
      %v2135 = vpop.f32.mrb[0].mxu0
      %v2136 = vadd.f32 0.0, %v2135
      %v2137 = vpop.f32.mrb[0].mxu0
      %v2138 = vpop.f32.mrb[0].mxu0
      %v2139 = vadd.f32 0.0, %v2138
      %v2140 = vpop.f32.mrb[0].mxu0
      %2141 = vmatprep.mubr.bf16.mxu0 0
      %2142 = vmatmul.mubr.bf16.gmra.mrb[0].mxu0 %v1361
      %v2143 = vpop.f32.mrb[0].mxu0
      %v2144 = vadd.f32 0.0, %v2143
      %v2145 = vpop.f32.mrb[0].mxu0
      %v2146 = vpop.f32.mrb[0].mxu0
      %v2147 = vadd.f32 0.0, %v2146
      %v2148 = vpop.f32.mrb[0].mxu0
      %2149 = vmatprep.mubr.bf16.mxu0 0
      %2150 = vmatmul.mubr.bf16.gmra.mrb[0].mxu0 %v1364
      %v2151 = vpop.f32.mrb[0].mxu0
      %v2152 = vadd.f32 0.0, %v2151
      %v2153 = vpop.f32.mrb[0].mxu0
      %v2154 = vpop.f32.mrb[0].mxu0
      %v2155 = vadd.f32 0.0, %v2154
      %v2156 = vpop.f32.mrb[0].mxu0
      %2157 = vmatprep.mubr.bf16.mxu0 0
      %2158 = vmatmul.mubr.bf16.gmra.mrb[0].mxu0 %v1367
      %v2159 = vpop.f32.mrb[0].mxu0
      %v2160 = vadd.f32 0.0, %v2159
      %v2161 = vpop.f32.mrb[0].mxu0
      %v2162 = vpop.f32.mrb[0].mxu0
      %v2163 = vadd.f32 0.0, %v2162
      %v2164 = vpop.f32.mrb[0].mxu0
      %2165 = vmatprep.mubr.bf16.mxu0 0
      %2166 = vmatmul.mubr.bf16.gmra.mrb[0].mxu0 %v1370
      %v2167 = vpop.f32.mrb[0].mxu0
      %v2168 = vadd.f32 0.0, %v2167
      %v2169 = vpop.f32.mrb[0].mxu0
      %v2170 = vpop.f32.mrb[0].mxu0
      %v2171 = vadd.f32 0.0, %v2170
      %v2172 = vpop.f32.mrb[0].mxu0
      %2173 = vmatprep.mubr.bf16.mxu0 0
      %2174 = vmatmul.mubr.bf16.gmra.mrb[0].mxu0 %v2016
      %v2175 = vpop.f32.mrb[0].mxu0
      %v2176 = vadd.f32 0.0, %v2175
      %v2177 = vpop.f32.mrb[0].mxu0
      %v2178 = vpop.f32.mrb[0].mxu0
      %v2179 = vadd.f32 0.0, %v2178
      %v2180 = vpop.f32.mrb[0].mxu0
      %2181 = vdwg.mxu0
      %v2182 = vadd.f32 %v1970, %v2056
      %v2183 = vadd.f32 %v1971, %v2059
      %v2184 = vadd.f32 %v1972, %v2064
      %v2185 = vadd.f32 %v1973, %v2067
      %v2186 = vadd.f32 %v1974, %v2072
      %v2187 = vadd.f32 %v1975, %v2075
      %v2188 = vadd.f32 %v1976, %v2080
      %v2189 = vadd.f32 %v1977, %v2083
      %v2190 = vadd.f32 %v1978, %v2088
      %v2191 = vadd.f32 %v1979, %v2091
      %v2192 = vadd.f32 %v1980, %v2096
      %v2193 = vadd.f32 %v1981, %v2099
      %v2194 = vadd.f32 %v1982, %v2104
      %v2195 = vadd.f32 %v1983, %v2107
      %v2196 = vadd.f32 %v1984, %v2112
      %v2197 = vadd.f32 %v1985, %v2115
      %v2198 = vadd.f32 %v1986, %v2120
      %v2199 = vadd.f32 %v1987, %v2123
      %v2200 = vadd.f32 %v1988, %v2128
      %v2201 = vadd.f32 %v1989, %v2131
      %v2202 = vadd.f32 %v1990, %v2136
      %v2203 = vadd.f32 %v1991, %v2139
      %v2204 = vadd.f32 %v1992, %v2144
      %v2205 = vadd.f32 %v1993, %v2147
      %v2206 = vadd.f32 %v1994, %v2152
      %v2207 = vadd.f32 %v1995, %v2155
      %v2208 = vadd.f32 %v1996, %v2160
      %v2209 = vadd.f32 %v1997, %v2163
      %v2210 = vadd.f32 %v1998, %v2168
      %v2211 = vadd.f32 %v1999, %v2171
      %v2212 = vadd.f32 %v2000, %v2176
      %v2213 = vadd.f32 %v2001, %v2179
      %s2214 = scalar_lea.vmem %s1, 12
      %v2215 = vld [vmem:[%s2214] sm:$0x3]
      %v2218 = vunpack.c.l.b16 %v196
      %v2219 = vunpack.c.l.b16 %v197
      %v2220 = vpack.c.b16 %v2219, %v2218
      %v2222 = vsel %vm637, %v2220, 0
      %v2225 = vsel %vm686, %v2215, 0
      %2227 = vmatprep.subr.bf16.mxu0 0
      %2228 = vmatpush1.bf16.msra.mxu0 %v2225
      %2229 = vmatprep.subr.bf16.mxu0 0
      %2230 = vmatpush1.bf16.msra.mxu0 0
      %2231 = vmatprep.subr.bf16.mxu0 0
      %2232 = vmatpush1.bf16.msra.mxu0 0
      %2233 = vmatprep.subr.bf16.mxu0 0
      %2234 = vmatpush1.bf16.msra.mxu0 0
      %2235 = vmatprep.subr.bf16.mxu0 0
      %2236 = vmatpush1.bf16.msra.mxu0 0
      %2237 = vmatprep.subr.bf16.mxu0 0
      %2238 = vmatpush1.bf16.msra.mxu0 0
      %2239 = vmatprep.subr.bf16.mxu0 0
      %2240 = vmatpush1.bf16.msra.mxu0 0
      %2241 = vmatprep.subr.bf16.mxu0 0
      %2242 = vmatpush1.bf16.msra.mxu0 0
      %2243 = vmatprep.subr.bf16.mxu0 0
      %2244 = vmatpush1.bf16.msra.mxu0 0
      %2245 = vmatprep.subr.bf16.mxu0 0
      %2246 = vmatpush1.bf16.msra.mxu0 0
      %2247 = vmatprep.subr.bf16.mxu0 0
      %2248 = vmatpush1.bf16.msra.mxu0 0
      %2249 = vmatprep.subr.bf16.mxu0 0
      %2250 = vmatpush1.bf16.msra.mxu0 0
      %2251 = vmatprep.subr.bf16.mxu0 0
      %2252 = vmatpush1.bf16.msra.mxu0 0
      %2253 = vmatprep.subr.bf16.mxu0 0
      %2254 = vmatpush1.bf16.msra.mxu0 0
      %2255 = vmatprep.subr.bf16.mxu0 0
      %2256 = vmatpush1.bf16.msra.mxu0 0
      %2257 = vmatprep.subr.bf16.mxu0 0
      %2258 = vmatpush1.bf16.msra.mxu0 0
      %2259 = vmatprep.mubr.bf16.mxu0 0
      %2260 = vmatmul.mubr.bf16.gmra.mrb[0].mxu0 %v938
      %v2261 = vpop.f32.mrb[0].mxu0
      %v2262 = vadd.f32 0.0, %v2261
      %v2263 = vpop.f32.mrb[0].mxu0
      %v2264 = vpop.f32.mrb[0].mxu0
      %v2265 = vadd.f32 0.0, %v2264
      %v2266 = vpop.f32.mrb[0].mxu0
      %2267 = vmatprep.mubr.bf16.mxu0 0
      %2268 = vmatmul.mubr.bf16.gmra.mrb[0].mxu0 %v941
      %v2269 = vpop.f32.mrb[0].mxu0
      %v2270 = vadd.f32 0.0, %v2269
      %v2271 = vpop.f32.mrb[0].mxu0
      %v2272 = vpop.f32.mrb[0].mxu0
      %v2273 = vadd.f32 0.0, %v2272
      %v2274 = vpop.f32.mrb[0].mxu0
      %2275 = vmatprep.mubr.bf16.mxu0 0
      %2276 = vmatmul.mubr.bf16.gmra.mrb[0].mxu0 %v944
      %v2277 = vpop.f32.mrb[0].mxu0
      %v2278 = vadd.f32 0.0, %v2277
      %v2279 = vpop.f32.mrb[0].mxu0
      %v2280 = vpop.f32.mrb[0].mxu0
      %v2281 = vadd.f32 0.0, %v2280
      %v2282 = vpop.f32.mrb[0].mxu0
      %2283 = vmatprep.mubr.bf16.mxu0 0
      %2284 = vmatmul.mubr.bf16.gmra.mrb[0].mxu0 %v947
      %v2285 = vpop.f32.mrb[0].mxu0
      %v2286 = vadd.f32 0.0, %v2285
      %v2287 = vpop.f32.mrb[0].mxu0
      %v2288 = vpop.f32.mrb[0].mxu0
      %v2289 = vadd.f32 0.0, %v2288
      %v2290 = vpop.f32.mrb[0].mxu0
      %2291 = vmatprep.mubr.bf16.mxu0 0
      %2292 = vmatmul.mubr.bf16.gmra.mrb[0].mxu0 %v950
      %v2293 = vpop.f32.mrb[0].mxu0
      %v2294 = vadd.f32 0.0, %v2293
      %v2295 = vpop.f32.mrb[0].mxu0
      %v2296 = vpop.f32.mrb[0].mxu0
      %v2297 = vadd.f32 0.0, %v2296
      %v2298 = vpop.f32.mrb[0].mxu0
      %2299 = vmatprep.mubr.bf16.mxu0 0
      %2300 = vmatmul.mubr.bf16.gmra.mrb[0].mxu0 %v953
      %v2301 = vpop.f32.mrb[0].mxu0
      %v2302 = vadd.f32 0.0, %v2301
      %v2303 = vpop.f32.mrb[0].mxu0
      %v2304 = vpop.f32.mrb[0].mxu0
      %v2305 = vadd.f32 0.0, %v2304
      %v2306 = vpop.f32.mrb[0].mxu0
      %2307 = vmatprep.mubr.bf16.mxu0 0
      %2308 = vmatmul.mubr.bf16.gmra.mrb[0].mxu0 %v956
      %v2309 = vpop.f32.mrb[0].mxu0
      %v2310 = vadd.f32 0.0, %v2309
      %v2311 = vpop.f32.mrb[0].mxu0
      %v2312 = vpop.f32.mrb[0].mxu0
      %v2313 = vadd.f32 0.0, %v2312
      %v2314 = vpop.f32.mrb[0].mxu0
      %2315 = vmatprep.mubr.bf16.mxu0 0
      %2316 = vmatmul.mubr.bf16.gmra.mrb[0].mxu0 %v959
      %v2317 = vpop.f32.mrb[0].mxu0
      %v2318 = vadd.f32 0.0, %v2317
      %v2319 = vpop.f32.mrb[0].mxu0
      %v2320 = vpop.f32.mrb[0].mxu0
      %v2321 = vadd.f32 0.0, %v2320
      %v2322 = vpop.f32.mrb[0].mxu0
      %2323 = vmatprep.mubr.bf16.mxu0 0
      %2324 = vmatmul.mubr.bf16.gmra.mrb[0].mxu0 %v962
      %v2325 = vpop.f32.mrb[0].mxu0
      %v2326 = vadd.f32 0.0, %v2325
      %v2327 = vpop.f32.mrb[0].mxu0
      %v2328 = vpop.f32.mrb[0].mxu0
      %v2329 = vadd.f32 0.0, %v2328
      %v2330 = vpop.f32.mrb[0].mxu0
      %2331 = vmatprep.mubr.bf16.mxu0 0
      %2332 = vmatmul.mubr.bf16.gmra.mrb[0].mxu0 %v965
      %v2333 = vpop.f32.mrb[0].mxu0
      %v2334 = vadd.f32 0.0, %v2333
      %v2335 = vpop.f32.mrb[0].mxu0
      %v2336 = vpop.f32.mrb[0].mxu0
      %v2337 = vadd.f32 0.0, %v2336
      %v2338 = vpop.f32.mrb[0].mxu0
      %2339 = vmatprep.mubr.bf16.mxu0 0
      %2340 = vmatmul.mubr.bf16.gmra.mrb[0].mxu0 %v968
      %v2341 = vpop.f32.mrb[0].mxu0
      %v2342 = vadd.f32 0.0, %v2341
      %v2343 = vpop.f32.mrb[0].mxu0
      %v2344 = vpop.f32.mrb[0].mxu0
      %v2345 = vadd.f32 0.0, %v2344
      %v2346 = vpop.f32.mrb[0].mxu0
      %2347 = vmatprep.mubr.bf16.mxu0 0
      %2348 = vmatmul.mubr.bf16.gmra.mrb[0].mxu0 %v971
      %v2349 = vpop.f32.mrb[0].mxu0
      %v2350 = vadd.f32 0.0, %v2349
      %v2351 = vpop.f32.mrb[0].mxu0
      %v2352 = vpop.f32.mrb[0].mxu0
      %v2353 = vadd.f32 0.0, %v2352
      %v2354 = vpop.f32.mrb[0].mxu0
      %2355 = vmatprep.mubr.bf16.mxu0 0
      %2356 = vmatmul.mubr.bf16.gmra.mrb[0].mxu0 %v974
      %v2357 = vpop.f32.mrb[0].mxu0
      %v2358 = vadd.f32 0.0, %v2357
      %v2359 = vpop.f32.mrb[0].mxu0
      %v2360 = vpop.f32.mrb[0].mxu0
      %v2361 = vadd.f32 0.0, %v2360
      %v2362 = vpop.f32.mrb[0].mxu0
      %2363 = vmatprep.mubr.bf16.mxu0 0
      %2364 = vmatmul.mubr.bf16.gmra.mrb[0].mxu0 %v977
      %v2365 = vpop.f32.mrb[0].mxu0
      %v2366 = vadd.f32 0.0, %v2365
      %v2367 = vpop.f32.mrb[0].mxu0
      %v2368 = vpop.f32.mrb[0].mxu0
      %v2369 = vadd.f32 0.0, %v2368
      %v2370 = vpop.f32.mrb[0].mxu0
      %2371 = vmatprep.mubr.bf16.mxu0 0
      %2372 = vmatmul.mubr.bf16.gmra.mrb[0].mxu0 %v1576
      %v2373 = vpop.f32.mrb[0].mxu0
      %v2374 = vadd.f32 0.0, %v2373
      %v2375 = vpop.f32.mrb[0].mxu0
      %v2376 = vpop.f32.mrb[0].mxu0
      %v2377 = vadd.f32 0.0, %v2376
      %v2378 = vpop.f32.mrb[0].mxu0
      %2379 = vmatprep.mubr.bf16.mxu0 0
      %2380 = vmatmul.mubr.bf16.gmra.mrb[0].mxu0 %v2222
      %v2381 = vpop.f32.mrb[0].mxu0
      %v2382 = vadd.f32 0.0, %v2381
      %v2383 = vpop.f32.mrb[0].mxu0
      %v2384 = vpop.f32.mrb[0].mxu0
      %v2385 = vadd.f32 0.0, %v2384
      %v2386 = vpop.f32.mrb[0].mxu0
      %2387 = vdwg.mxu0
      %v2388 = vadd.f32 %v2182, %v2262
      %v2389 = vadd.f32 %v2183, %v2265
      %v2390 = vadd.f32 %v2184, %v2270
      %v2391 = vadd.f32 %v2185, %v2273
      %v2392 = vadd.f32 %v2186, %v2278
      %v2393 = vadd.f32 %v2187, %v2281
      %v2394 = vadd.f32 %v2188, %v2286
      %v2395 = vadd.f32 %v2189, %v2289
      %v2396 = vadd.f32 %v2190, %v2294
      %v2397 = vadd.f32 %v2191, %v2297
      %v2398 = vadd.f32 %v2192, %v2302
      %v2399 = vadd.f32 %v2193, %v2305
      %v2400 = vadd.f32 %v2194, %v2310
      %v2401 = vadd.f32 %v2195, %v2313
      %v2402 = vadd.f32 %v2196, %v2318
      %v2403 = vadd.f32 %v2197, %v2321
      %v2404 = vadd.f32 %v2198, %v2326
      %v2405 = vadd.f32 %v2199, %v2329
      %v2406 = vadd.f32 %v2200, %v2334
      %v2407 = vadd.f32 %v2201, %v2337
      %v2408 = vadd.f32 %v2202, %v2342
      %v2409 = vadd.f32 %v2203, %v2345
      %v2410 = vadd.f32 %v2204, %v2350
      %v2411 = vadd.f32 %v2205, %v2353
      %v2412 = vadd.f32 %v2206, %v2358
      %v2413 = vadd.f32 %v2207, %v2361
      %v2414 = vadd.f32 %v2208, %v2366
      %v2415 = vadd.f32 %v2209, %v2369
      %v2416 = vadd.f32 %v2210, %v2374
      %v2417 = vadd.f32 %v2211, %v2377
      %v2418 = vadd.f32 %v2212, %v2382
      %v2419 = vadd.f32 %v2213, %v2385
      %v2421 = vshrl.u32 %v196, 16
      %v2423 = vrot.slane %v2421, 4
      %v2424 = vshll.u32 %v196, 16
      %v2426 = vrot.slane %v2424, 5
      %v2427 = vor.u32 %v2423, %v2426
      %v2428 = vrot.slane %v2427, 4
      %v2430 = vshll.u32 %v197, 16
      %v2432 = vrot.slane %v2430, 5
      %v2433 = vsel %vm202, %v2428, %v2432
      %v2434 = vshrl.u32 %v197, 16
      %v2436 = vrot.slane %v2434, 4
      %v2437 = vor.u32 %v2436, %v2432
      %v2438 = vrot.slane %v2437, 4
      %v2440 = vshll.u32 %v198, 16
      %v2442 = vrot.slane %v2440, 5
      %v2443 = vsel %vm202, %v2438, %v2442
      %s2444 = scalar_lea.vmem %s1, 14
      %v2445 = vld [vmem:[%s2444] sm:$0x3]
      %v2446 = vunpack.c.l.b16 %v2433
      %v2447 = vunpack.c.l.b16 %v2443
      %v2448 = vpack.c.b16 %v2447, %v2446
      %v2450 = vsel %vm637, %v2448, 0
      %v2453 = vsel %vm686, %v2445, 0
      %2455 = vmatprep.subr.bf16.mxu0 0
      %2456 = vmatpush1.bf16.msra.mxu0 %v2453
      %2457 = vmatprep.subr.bf16.mxu0 0
      %2458 = vmatpush1.bf16.msra.mxu0 0
      %2459 = vmatprep.subr.bf16.mxu0 0
      %2460 = vmatpush1.bf16.msra.mxu0 0
      %2461 = vmatprep.subr.bf16.mxu0 0
      %2462 = vmatpush1.bf16.msra.mxu0 0
      %2463 = vmatprep.subr.bf16.mxu0 0
      %2464 = vmatpush1.bf16.msra.mxu0 0
      %2465 = vmatprep.subr.bf16.mxu0 0
      %2466 = vmatpush1.bf16.msra.mxu0 0
      %2467 = vmatprep.subr.bf16.mxu0 0
      %2468 = vmatpush1.bf16.msra.mxu0 0
      %2469 = vmatprep.subr.bf16.mxu0 0
      %2470 = vmatpush1.bf16.msra.mxu0 0
      %2471 = vmatprep.subr.bf16.mxu0 0
      %2472 = vmatpush1.bf16.msra.mxu0 0
      %2473 = vmatprep.subr.bf16.mxu0 0
      %2474 = vmatpush1.bf16.msra.mxu0 0
      %2475 = vmatprep.subr.bf16.mxu0 0
      %2476 = vmatpush1.bf16.msra.mxu0 0
      %2477 = vmatprep.subr.bf16.mxu0 0
      %2478 = vmatpush1.bf16.msra.mxu0 0
      %2479 = vmatprep.subr.bf16.mxu0 0
      %2480 = vmatpush1.bf16.msra.mxu0 0
      %2481 = vmatprep.subr.bf16.mxu0 0
      %2482 = vmatpush1.bf16.msra.mxu0 0
      %2483 = vmatprep.subr.bf16.mxu0 0
      %2484 = vmatpush1.bf16.msra.mxu0 0
      %2485 = vmatprep.subr.bf16.mxu0 0
      %2486 = vmatpush1.bf16.msra.mxu0 0
      %2487 = vmatprep.mubr.bf16.mxu0 0
      %2488 = vmatmul.mubr.bf16.gmra.mrb[0].mxu0 %v645
      %v2489 = vpop.f32.mrb[0].mxu0
      %v2490 = vadd.f32 0.0, %v2489
      %v2491 = vpop.f32.mrb[0].mxu0
      %v2492 = vpop.f32.mrb[0].mxu0
      %v2493 = vadd.f32 0.0, %v2492
      %v2494 = vpop.f32.mrb[0].mxu0
      %2495 = vmatprep.mubr.bf16.mxu0 0
      %2496 = vmatmul.mubr.bf16.gmra.mrb[0].mxu0 %v648
      %v2497 = vpop.f32.mrb[0].mxu0
      %v2498 = vadd.f32 0.0, %v2497
      %v2499 = vpop.f32.mrb[0].mxu0
      %v2500 = vpop.f32.mrb[0].mxu0
      %v2501 = vadd.f32 0.0, %v2500
      %v2502 = vpop.f32.mrb[0].mxu0
      %2503 = vmatprep.mubr.bf16.mxu0 0
      %2504 = vmatmul.mubr.bf16.gmra.mrb[0].mxu0 %v651
      %v2505 = vpop.f32.mrb[0].mxu0
      %v2506 = vadd.f32 0.0, %v2505
      %v2507 = vpop.f32.mrb[0].mxu0
      %v2508 = vpop.f32.mrb[0].mxu0
      %v2509 = vadd.f32 0.0, %v2508
      %v2510 = vpop.f32.mrb[0].mxu0
      %2511 = vmatprep.mubr.bf16.mxu0 0
      %2512 = vmatmul.mubr.bf16.gmra.mrb[0].mxu0 %v654
      %v2513 = vpop.f32.mrb[0].mxu0
      %v2514 = vadd.f32 0.0, %v2513
      %v2515 = vpop.f32.mrb[0].mxu0
      %v2516 = vpop.f32.mrb[0].mxu0
      %v2517 = vadd.f32 0.0, %v2516
      %v2518 = vpop.f32.mrb[0].mxu0
      %2519 = vmatprep.mubr.bf16.mxu0 0
      %2520 = vmatmul.mubr.bf16.gmra.mrb[0].mxu0 %v657
      %v2521 = vpop.f32.mrb[0].mxu0
      %v2522 = vadd.f32 0.0, %v2521
      %v2523 = vpop.f32.mrb[0].mxu0
      %v2524 = vpop.f32.mrb[0].mxu0
      %v2525 = vadd.f32 0.0, %v2524
      %v2526 = vpop.f32.mrb[0].mxu0
      %2527 = vmatprep.mubr.bf16.mxu0 0
      %2528 = vmatmul.mubr.bf16.gmra.mrb[0].mxu0 %v660
      %v2529 = vpop.f32.mrb[0].mxu0
      %v2530 = vadd.f32 0.0, %v2529
      %v2531 = vpop.f32.mrb[0].mxu0
      %v2532 = vpop.f32.mrb[0].mxu0
      %v2533 = vadd.f32 0.0, %v2532
      %v2534 = vpop.f32.mrb[0].mxu0
      %2535 = vmatprep.mubr.bf16.mxu0 0
      %2536 = vmatmul.mubr.bf16.gmra.mrb[0].mxu0 %v663
      %v2537 = vpop.f32.mrb[0].mxu0
      %v2538 = vadd.f32 0.0, %v2537
      %v2539 = vpop.f32.mrb[0].mxu0
      %v2540 = vpop.f32.mrb[0].mxu0
      %v2541 = vadd.f32 0.0, %v2540
      %v2542 = vpop.f32.mrb[0].mxu0
      %2543 = vmatprep.mubr.bf16.mxu0 0
      %2544 = vmatmul.mubr.bf16.gmra.mrb[0].mxu0 %v666
      %v2545 = vpop.f32.mrb[0].mxu0
      %v2546 = vadd.f32 0.0, %v2545
      %v2547 = vpop.f32.mrb[0].mxu0
      %v2548 = vpop.f32.mrb[0].mxu0
      %v2549 = vadd.f32 0.0, %v2548
      %v2550 = vpop.f32.mrb[0].mxu0
      %2551 = vmatprep.mubr.bf16.mxu0 0
      %2552 = vmatmul.mubr.bf16.gmra.mrb[0].mxu0 %v669
      %v2553 = vpop.f32.mrb[0].mxu0
      %v2554 = vadd.f32 0.0, %v2553
      %v2555 = vpop.f32.mrb[0].mxu0
      %v2556 = vpop.f32.mrb[0].mxu0
      %v2557 = vadd.f32 0.0, %v2556
      %v2558 = vpop.f32.mrb[0].mxu0
      %2559 = vmatprep.mubr.bf16.mxu0 0
      %2560 = vmatmul.mubr.bf16.gmra.mrb[0].mxu0 %v672
      %v2561 = vpop.f32.mrb[0].mxu0
      %v2562 = vadd.f32 0.0, %v2561
      %v2563 = vpop.f32.mrb[0].mxu0
      %v2564 = vpop.f32.mrb[0].mxu0
      %v2565 = vadd.f32 0.0, %v2564
      %v2566 = vpop.f32.mrb[0].mxu0
      %2567 = vmatprep.mubr.bf16.mxu0 0
      %2568 = vmatmul.mubr.bf16.gmra.mrb[0].mxu0 %v675
      %v2569 = vpop.f32.mrb[0].mxu0
      %v2570 = vadd.f32 0.0, %v2569
      %v2571 = vpop.f32.mrb[0].mxu0
      %v2572 = vpop.f32.mrb[0].mxu0
      %v2573 = vadd.f32 0.0, %v2572
      %v2574 = vpop.f32.mrb[0].mxu0
      %2575 = vmatprep.mubr.bf16.mxu0 0
      %2576 = vmatmul.mubr.bf16.gmra.mrb[0].mxu0 %v678
      %v2577 = vpop.f32.mrb[0].mxu0
      %v2578 = vadd.f32 0.0, %v2577
      %v2579 = vpop.f32.mrb[0].mxu0
      %v2580 = vpop.f32.mrb[0].mxu0
      %v2581 = vadd.f32 0.0, %v2580
      %v2582 = vpop.f32.mrb[0].mxu0
      %2583 = vmatprep.mubr.bf16.mxu0 0
      %2584 = vmatmul.mubr.bf16.gmra.mrb[0].mxu0 %v681
      %v2585 = vpop.f32.mrb[0].mxu0
      %v2586 = vadd.f32 0.0, %v2585
      %v2587 = vpop.f32.mrb[0].mxu0
      %v2588 = vpop.f32.mrb[0].mxu0
      %v2589 = vadd.f32 0.0, %v2588
      %v2590 = vpop.f32.mrb[0].mxu0
      %2591 = vmatprep.mubr.bf16.mxu0 0
      %2592 = vmatmul.mubr.bf16.gmra.mrb[0].mxu0 %v684
      %v2593 = vpop.f32.mrb[0].mxu0
      %v2594 = vadd.f32 0.0, %v2593
      %v2595 = vpop.f32.mrb[0].mxu0
      %v2596 = vpop.f32.mrb[0].mxu0
      %v2597 = vadd.f32 0.0, %v2596
      %v2598 = vpop.f32.mrb[0].mxu0
      %2599 = vmatprep.mubr.bf16.mxu0 0
      %2600 = vmatmul.mubr.bf16.gmra.mrb[0].mxu0 %v1804
      %v2601 = vpop.f32.mrb[0].mxu0
      %v2602 = vadd.f32 0.0, %v2601
      %v2603 = vpop.f32.mrb[0].mxu0
      %v2604 = vpop.f32.mrb[0].mxu0
      %v2605 = vadd.f32 0.0, %v2604
      %v2606 = vpop.f32.mrb[0].mxu0
      %2607 = vmatprep.mubr.bf16.mxu0 0
      %2608 = vmatmul.mubr.bf16.gmra.mrb[0].mxu0 %v2450
      %v2609 = vpop.f32.mrb[0].mxu0
      %v2610 = vadd.f32 0.0, %v2609
      %v2611 = vpop.f32.mrb[0].mxu0
      %v2612 = vpop.f32.mrb[0].mxu0
      %v2613 = vadd.f32 0.0, %v2612
      %v2614 = vpop.f32.mrb[0].mxu0
      %2615 = vdwg.mxu0
      %v2616 = vadd.f32 %v2388, %v2490
      %v2617 = vadd.f32 %v2389, %v2493
      %v2618 = vadd.f32 %v2390, %v2498
      %v2619 = vadd.f32 %v2391, %v2501
      %v2620 = vadd.f32 %v2392, %v2506
      %v2621 = vadd.f32 %v2393, %v2509
      %v2622 = vadd.f32 %v2394, %v2514
      %v2623 = vadd.f32 %v2395, %v2517
      %v2624 = vadd.f32 %v2396, %v2522
      %v2625 = vadd.f32 %v2397, %v2525
      %v2626 = vadd.f32 %v2398, %v2530
      %v2627 = vadd.f32 %v2399, %v2533
      %v2628 = vadd.f32 %v2400, %v2538
      %v2629 = vadd.f32 %v2401, %v2541
      %v2630 = vadd.f32 %v2402, %v2546
      %v2631 = vadd.f32 %v2403, %v2549
      %v2632 = vadd.f32 %v2404, %v2554
      %v2633 = vadd.f32 %v2405, %v2557
      %v2634 = vadd.f32 %v2406, %v2562
      %v2635 = vadd.f32 %v2407, %v2565
      %v2636 = vadd.f32 %v2408, %v2570
      %v2637 = vadd.f32 %v2409, %v2573
      %v2638 = vadd.f32 %v2410, %v2578
      %v2639 = vadd.f32 %v2411, %v2581
      %v2640 = vadd.f32 %v2412, %v2586
      %v2641 = vadd.f32 %v2413, %v2589
      %v2642 = vadd.f32 %v2414, %v2594
      %v2643 = vadd.f32 %v2415, %v2597
      %v2644 = vadd.f32 %v2416, %v2602
      %v2645 = vadd.f32 %v2417, %v2605
      %v2646 = vadd.f32 %v2418, %v2610
      %v2647 = vadd.f32 %v2419, %v2613
      %v2649 = vrot.slane %v196, 5
      %v2650 = vrot.slane %v2649, 4
      %v2651 = vrot.slane %v197, 5
      %v2652 = vsel %vm1161, %v2650, %v2651
      %v2653 = vrot.slane %v2651, 4
      %v2654 = vrot.slane %v198, 5
      %v2655 = vsel %vm1161, %v2653, %v2654
      %s2656 = scalar_lea.vmem %s1, 16
      %v2657 = vld [vmem:[%s2656] sm:$0x3]
      %v2658 = vunpack.c.l.b16 %v2652
      %v2659 = vunpack.c.l.b16 %v2655
      %v2660 = vpack.c.b16 %v2659, %v2658
      %v2662 = vsel %vm637, %v2660, 0
      %v2665 = vsel %vm686, %v2657, 0
      %2667 = vmatprep.subr.bf16.mxu0 0
      %2668 = vmatpush1.bf16.msra.mxu0 %v2665
      %2669 = vmatprep.subr.bf16.mxu0 0
      %2670 = vmatpush1.bf16.msra.mxu0 0
      %2671 = vmatprep.subr.bf16.mxu0 0
      %2672 = vmatpush1.bf16.msra.mxu0 0
      %2673 = vmatprep.subr.bf16.mxu0 0
      %2674 = vmatpush1.bf16.msra.mxu0 0
      %2675 = vmatprep.subr.bf16.mxu0 0
      %2676 = vmatpush1.bf16.msra.mxu0 0
      %2677 = vmatprep.subr.bf16.mxu0 0
      %2678 = vmatpush1.bf16.msra.mxu0 0
      %2679 = vmatprep.subr.bf16.mxu0 0
      %2680 = vmatpush1.bf16.msra.mxu0 0
      %2681 = vmatprep.subr.bf16.mxu0 0
      %2682 = vmatpush1.bf16.msra.mxu0 0
      %2683 = vmatprep.subr.bf16.mxu0 0
      %2684 = vmatpush1.bf16.msra.mxu0 0
      %2685 = vmatprep.subr.bf16.mxu0 0
      %2686 = vmatpush1.bf16.msra.mxu0 0
      %2687 = vmatprep.subr.bf16.mxu0 0
      %2688 = vmatpush1.bf16.msra.mxu0 0
      %2689 = vmatprep.subr.bf16.mxu0 0
      %2690 = vmatpush1.bf16.msra.mxu0 0
      %2691 = vmatprep.subr.bf16.mxu0 0
      %2692 = vmatpush1.bf16.msra.mxu0 0
      %2693 = vmatprep.subr.bf16.mxu0 0
      %2694 = vmatpush1.bf16.msra.mxu0 0
      %2695 = vmatprep.subr.bf16.mxu0 0
      %2696 = vmatpush1.bf16.msra.mxu0 0
      %2697 = vmatprep.subr.bf16.mxu0 0
      %2698 = vmatpush1.bf16.msra.mxu0 0
      %2699 = vmatprep.mubr.bf16.mxu0 0
      %2700 = vmatmul.mubr.bf16.gmra.mrb[0].mxu0 %v1331
      %v2701 = vpop.f32.mrb[0].mxu0
      %v2702 = vadd.f32 0.0, %v2701
      %v2703 = vpop.f32.mrb[0].mxu0
      %v2704 = vpop.f32.mrb[0].mxu0
      %v2705 = vadd.f32 0.0, %v2704
      %v2706 = vpop.f32.mrb[0].mxu0
      %2707 = vmatprep.mubr.bf16.mxu0 0
      %2708 = vmatmul.mubr.bf16.gmra.mrb[0].mxu0 %v1334
      %v2709 = vpop.f32.mrb[0].mxu0
      %v2710 = vadd.f32 0.0, %v2709
      %v2711 = vpop.f32.mrb[0].mxu0
      %v2712 = vpop.f32.mrb[0].mxu0
      %v2713 = vadd.f32 0.0, %v2712
      %v2714 = vpop.f32.mrb[0].mxu0
      %2715 = vmatprep.mubr.bf16.mxu0 0
      %2716 = vmatmul.mubr.bf16.gmra.mrb[0].mxu0 %v1337
      %v2717 = vpop.f32.mrb[0].mxu0
      %v2718 = vadd.f32 0.0, %v2717
      %v2719 = vpop.f32.mrb[0].mxu0
      %v2720 = vpop.f32.mrb[0].mxu0
      %v2721 = vadd.f32 0.0, %v2720
      %v2722 = vpop.f32.mrb[0].mxu0
      %2723 = vmatprep.mubr.bf16.mxu0 0
      %2724 = vmatmul.mubr.bf16.gmra.mrb[0].mxu0 %v1340
      %v2725 = vpop.f32.mrb[0].mxu0
      %v2726 = vadd.f32 0.0, %v2725
      %v2727 = vpop.f32.mrb[0].mxu0
      %v2728 = vpop.f32.mrb[0].mxu0
      %v2729 = vadd.f32 0.0, %v2728
      %v2730 = vpop.f32.mrb[0].mxu0
      %2731 = vmatprep.mubr.bf16.mxu0 0
      %2732 = vmatmul.mubr.bf16.gmra.mrb[0].mxu0 %v1343
      %v2733 = vpop.f32.mrb[0].mxu0
      %v2734 = vadd.f32 0.0, %v2733
      %v2735 = vpop.f32.mrb[0].mxu0
      %v2736 = vpop.f32.mrb[0].mxu0
      %v2737 = vadd.f32 0.0, %v2736
      %v2738 = vpop.f32.mrb[0].mxu0
      %2739 = vmatprep.mubr.bf16.mxu0 0
      %2740 = vmatmul.mubr.bf16.gmra.mrb[0].mxu0 %v1346
      %v2741 = vpop.f32.mrb[0].mxu0
      %v2742 = vadd.f32 0.0, %v2741
      %v2743 = vpop.f32.mrb[0].mxu0
      %v2744 = vpop.f32.mrb[0].mxu0
      %v2745 = vadd.f32 0.0, %v2744
      %v2746 = vpop.f32.mrb[0].mxu0
      %2747 = vmatprep.mubr.bf16.mxu0 0
      %2748 = vmatmul.mubr.bf16.gmra.mrb[0].mxu0 %v1349
      %v2749 = vpop.f32.mrb[0].mxu0
      %v2750 = vadd.f32 0.0, %v2749
      %v2751 = vpop.f32.mrb[0].mxu0
      %v2752 = vpop.f32.mrb[0].mxu0
      %v2753 = vadd.f32 0.0, %v2752
      %v2754 = vpop.f32.mrb[0].mxu0
      %2755 = vmatprep.mubr.bf16.mxu0 0
      %2756 = vmatmul.mubr.bf16.gmra.mrb[0].mxu0 %v1352
      %v2757 = vpop.f32.mrb[0].mxu0
      %v2758 = vadd.f32 0.0, %v2757
      %v2759 = vpop.f32.mrb[0].mxu0
      %v2760 = vpop.f32.mrb[0].mxu0
      %v2761 = vadd.f32 0.0, %v2760
      %v2762 = vpop.f32.mrb[0].mxu0
      %2763 = vmatprep.mubr.bf16.mxu0 0
      %2764 = vmatmul.mubr.bf16.gmra.mrb[0].mxu0 %v1355
      %v2765 = vpop.f32.mrb[0].mxu0
      %v2766 = vadd.f32 0.0, %v2765
      %v2767 = vpop.f32.mrb[0].mxu0
      %v2768 = vpop.f32.mrb[0].mxu0
      %v2769 = vadd.f32 0.0, %v2768
      %v2770 = vpop.f32.mrb[0].mxu0
      %2771 = vmatprep.mubr.bf16.mxu0 0
      %2772 = vmatmul.mubr.bf16.gmra.mrb[0].mxu0 %v1358
      %v2773 = vpop.f32.mrb[0].mxu0
      %v2774 = vadd.f32 0.0, %v2773
      %v2775 = vpop.f32.mrb[0].mxu0
      %v2776 = vpop.f32.mrb[0].mxu0
      %v2777 = vadd.f32 0.0, %v2776
      %v2778 = vpop.f32.mrb[0].mxu0
      %2779 = vmatprep.mubr.bf16.mxu0 0
      %2780 = vmatmul.mubr.bf16.gmra.mrb[0].mxu0 %v1361
      %v2781 = vpop.f32.mrb[0].mxu0
      %v2782 = vadd.f32 0.0, %v2781
      %v2783 = vpop.f32.mrb[0].mxu0
      %v2784 = vpop.f32.mrb[0].mxu0
      %v2785 = vadd.f32 0.0, %v2784
      %v2786 = vpop.f32.mrb[0].mxu0
      %2787 = vmatprep.mubr.bf16.mxu0 0
      %2788 = vmatmul.mubr.bf16.gmra.mrb[0].mxu0 %v1364
      %v2789 = vpop.f32.mrb[0].mxu0
      %v2790 = vadd.f32 0.0, %v2789
      %v2791 = vpop.f32.mrb[0].mxu0
      %v2792 = vpop.f32.mrb[0].mxu0
      %v2793 = vadd.f32 0.0, %v2792
      %v2794 = vpop.f32.mrb[0].mxu0
      %2795 = vmatprep.mubr.bf16.mxu0 0
      %2796 = vmatmul.mubr.bf16.gmra.mrb[0].mxu0 %v1367
      %v2797 = vpop.f32.mrb[0].mxu0
      %v2798 = vadd.f32 0.0, %v2797
      %v2799 = vpop.f32.mrb[0].mxu0
      %v2800 = vpop.f32.mrb[0].mxu0
      %v2801 = vadd.f32 0.0, %v2800
      %v2802 = vpop.f32.mrb[0].mxu0
      %2803 = vmatprep.mubr.bf16.mxu0 0
      %2804 = vmatmul.mubr.bf16.gmra.mrb[0].mxu0 %v1370
      %v2805 = vpop.f32.mrb[0].mxu0
      %v2806 = vadd.f32 0.0, %v2805
      %v2807 = vpop.f32.mrb[0].mxu0
      %v2808 = vpop.f32.mrb[0].mxu0
      %v2809 = vadd.f32 0.0, %v2808
      %v2810 = vpop.f32.mrb[0].mxu0
      %2811 = vmatprep.mubr.bf16.mxu0 0
      %2812 = vmatmul.mubr.bf16.gmra.mrb[0].mxu0 %v2016
      %v2813 = vpop.f32.mrb[0].mxu0
      %v2814 = vadd.f32 0.0, %v2813
      %v2815 = vpop.f32.mrb[0].mxu0
      %v2816 = vpop.f32.mrb[0].mxu0
      %v2817 = vadd.f32 0.0, %v2816
      %v2818 = vpop.f32.mrb[0].mxu0
      %2819 = vmatprep.mubr.bf16.mxu0 0
      %2820 = vmatmul.mubr.bf16.gmra.mrb[0].mxu0 %v2662
      %v2821 = vpop.f32.mrb[0].mxu0
      %v2822 = vadd.f32 0.0, %v2821
      %v2823 = vpop.f32.mrb[0].mxu0
      %v2824 = vpop.f32.mrb[0].mxu0
      %v2825 = vadd.f32 0.0, %v2824
      %v2826 = vpop.f32.mrb[0].mxu0
      %2827 = vdwg.mxu0
      %v2828 = vadd.f32 %v2616, %v2702
      %v2829 = vadd.f32 %v2617, %v2705
      %v2830 = vadd.f32 %v2618, %v2710
      %v2831 = vadd.f32 %v2619, %v2713
      %v2832 = vadd.f32 %v2620, %v2718
      %v2833 = vadd.f32 %v2621, %v2721
      %v2834 = vadd.f32 %v2622, %v2726
      %v2835 = vadd.f32 %v2623, %v2729
      %v2836 = vadd.f32 %v2624, %v2734
      %v2837 = vadd.f32 %v2625, %v2737
      %v2838 = vadd.f32 %v2626, %v2742
      %v2839 = vadd.f32 %v2627, %v2745
      %v2840 = vadd.f32 %v2628, %v2750
      %v2841 = vadd.f32 %v2629, %v2753
      %v2842 = vadd.f32 %v2630, %v2758
      %v2843 = vadd.f32 %v2631, %v2761
      %v2844 = vadd.f32 %v2632, %v2766
      %v2845 = vadd.f32 %v2633, %v2769
      %v2846 = vadd.f32 %v2634, %v2774
      %v2847 = vadd.f32 %v2635, %v2777
      %v2848 = vadd.f32 %v2636, %v2782
      %v2849 = vadd.f32 %v2637, %v2785
      %v2850 = vadd.f32 %v2638, %v2790
      %v2851 = vadd.f32 %v2639, %v2793
      %v2852 = vadd.f32 %v2640, %v2798
      %v2853 = vadd.f32 %v2641, %v2801
      %v2854 = vadd.f32 %v2642, %v2806
      %v2855 = vadd.f32 %v2643, %v2809
      %v2856 = vadd.f32 %v2644, %v2814
      %v2857 = vadd.f32 %v2645, %v2817
      %v2858 = vadd.f32 %v2646, %v2822
      %v2859 = vadd.f32 %v2647, %v2825
      %v2860 = vmax.f32 %v2828, 0.0
      %v2861 = vmax.f32 %v2829, 0.0
      %v2862 = vmax.f32 %v2830, 0.0
      %v2863 = vmax.f32 %v2831, 0.0
      %v2864 = vmax.f32 %v2832, 0.0
      %v2865 = vmax.f32 %v2833, 0.0
      %v2866 = vmax.f32 %v2834, 0.0
      %v2867 = vmax.f32 %v2835, 0.0
      %v2868 = vmax.f32 %v2836, 0.0
      %v2869 = vmax.f32 %v2837, 0.0
      %v2870 = vmax.f32 %v2838, 0.0
      %v2871 = vmax.f32 %v2839, 0.0
      %v2872 = vmax.f32 %v2840, 0.0
      %v2873 = vmax.f32 %v2841, 0.0
      %v2874 = vmax.f32 %v2842, 0.0
      %v2875 = vmax.f32 %v2843, 0.0
      %v2876 = vmax.f32 %v2844, 0.0
      %v2877 = vmax.f32 %v2845, 0.0
      %v2878 = vmax.f32 %v2846, 0.0
      %v2879 = vmax.f32 %v2847, 0.0
      %v2880 = vmax.f32 %v2848, 0.0
      %v2881 = vmax.f32 %v2849, 0.0
      %v2882 = vmax.f32 %v2850, 0.0
      %v2883 = vmax.f32 %v2851, 0.0
      %v2884 = vmax.f32 %v2852, 0.0
      %v2885 = vmax.f32 %v2853, 0.0
      %v2886 = vmax.f32 %v2854, 0.0
      %v2887 = vmax.f32 %v2855, 0.0
      %v2888 = vmax.f32 %v2856, 0.0
      %v2889 = vmax.f32 %v2857, 0.0
      %v2890 = vmax.f32 %v2858, 0.0
      %v2891 = vmax.f32 %v2859, 0.0
      %2892 = vst [vmem:[%s143] sm:$0xff] %v2860
      %2893 = vst [vmem:[%s143 + $0x8] sm:$0xff] %v2861
      %2894 = vst [vmem:[%s143 + $0x10] sm:$0xff] %v2862
      %2895 = vst [vmem:[%s143 + $0x18] sm:$0xff] %v2863
      %2896 = vst [vmem:[%s143 + $0x20] sm:$0xff] %v2864
      %2897 = vst [vmem:[%s143 + $0x28] sm:$0xff] %v2865
      %2898 = vst [vmem:[%s143 + $0x30] sm:$0xff] %v2866
      %2899 = vst [vmem:[%s143 + $0x38] sm:$0xff] %v2867
      %2900 = vst [vmem:[%s143 + $0x40] sm:$0xff] %v2868
      %2901 = vst [vmem:[%s143 + $0x48] sm:$0xff] %v2869
      %2902 = vst [vmem:[%s143 + $0x50] sm:$0xff] %v2870
      %2903 = vst [vmem:[%s143 + $0x58] sm:$0xff] %v2871
      %2904 = vst [vmem:[%s143 + $0x60] sm:$0xff] %v2872
      %2905 = vst [vmem:[%s143 + $0x68] sm:$0xff] %v2873
      %2906 = vst [vmem:[%s143 + $0x70] sm:$0xff] %v2874
      %2907 = vst [vmem:[%s143 + $0x78] sm:$0xff] %v2875
      %2908 = vst [vmem:[%s143 + $0x80] sm:$0xff] %v2876
      %2909 = vst [vmem:[%s143 + $0x88] sm:$0xff] %v2877
      %2910 = vst [vmem:[%s143 + $0x90] sm:$0xff] %v2878
      %2911 = vst [vmem:[%s143 + $0x98] sm:$0xff] %v2879
      %2912 = vst [vmem:[%s143 + $0xa0] sm:$0xff] %v2880
      %2913 = vst [vmem:[%s143 + $0xa8] sm:$0xff] %v2881
      %2914 = vst [vmem:[%s143 + $0xb0] sm:$0xff] %v2882
      %2915 = vst [vmem:[%s143 + $0xb8] sm:$0xff] %v2883
      %2916 = vst [vmem:[%s143 + $0xc0] sm:$0xff] %v2884
      %2917 = vst [vmem:[%s143 + $0xc8] sm:$0xff] %v2885
      %2918 = vst [vmem:[%s143 + $0xd0] sm:$0xff] %v2886
      %2919 = vst [vmem:[%s143 + $0xd8] sm:$0xff] %v2887
      %2920 = vst [vmem:[%s143 + $0xe0] sm:$0xff] %v2888
      %2921 = vst [vmem:[%s143 + $0xe8] sm:$0xff] %v2889
      %2922 = vst [vmem:[%s143 + $0xf0] sm:$0xff] %v2890
      %2923 = vst [vmem:[%s143 + $0xf8] sm:$0xff] %v2891
      %p2924 = scmp.lt.s32.totalorder %s13, 1
      %s2925 = scalar_select %p2924, %s13, 1
      %s2926 = smul.addr %s2925, 32
      %s2927 = smul.addr %s2926, 8
      %s2928 = scalar_lea.vmem %s2, %s2927
      // Predicated region
      $region29: #{basic_conv_forward.1} parent=27 // pred_check
        %p2929 = pneg %p78
      $region30: #{basic_conv_forward.1} parent=27 // pred_check_branch
        %2931 = sbr.rel (%p2929) target = $region32
      $region31: #{basic_conv_forward.1} parent=27 // pred_region
        _
      $region32: #{basic_conv_forward.1} parent=27 // pred_fallthru
        _
    $region28: #{basic_conv_forward.1} parent=5 // pred_fallthru
      _
    %p2932 = scmp.le.s32.totalorder 2, %s8
    // Predicated region
    $region33: #{basic_conv_forward.1} parent=5 // pred_check
      %p2933 = pneg %p2932
    $region34: #{basic_conv_forward.1} parent=5 // pred_check_branch
      %2935 = sbr.rel (%p2933) target = $region36
    $region35: #{basic_conv_forward.1} parent=5 // pred_region
      %s2936 = ssub.s32 %s8, 2
      // Predicated region
      $region37: #{basic_conv_forward.1} parent=35 // pred_check
        %p2937 = pneg %p84
      $region38: #{basic_conv_forward.1} parent=35 // pred_check_branch
        %2939 = sbr.rel (%p2937) target = $region40
      $region39: #{basic_conv_forward.1} parent=35 // pred_region
        %p2940 = scmp.lt.s32.totalorder %s14, 1
        %s2941 = scalar_select %p2940, %s14, 1
        %s2942 = smul.addr %s2941, 32
        %s2943 = smul.addr %s2942, 8
        %s2944 = scalar_lea.vmem %s2, %s2943
      $region40: #{basic_conv_forward.1} parent=35 // pred_fallthru
        _
    $region36: #{basic_conv_forward.1} parent=5 // pred_fallthru
      _
  $region6: #{basic_conv_forward.1} parent=0 // loop_footer
    %s12 = sadd.s32 1, %s8
  $region7: #{basic_conv_forward.1} parent=0 // loop_footer_branch
    %7 = sbr.rel target = $region3
  $region8: #{basic_conv_forward.1} parent=0 // loop_exit
    _

</llo_original>
